<compile_context>
chip_gen: v7x
topology: tpu7x:2x2x1
jax: 0.10.0
libtpu: 0.0.40
codegen_flags: <defaults>
</compile_context>

<pallas_src>
import functools

import jax
import jax.numpy as jnp
from jax.experimental import pallas as pl
from jax.experimental.pallas import tpu as pltpu


# ---------------------------------------------------------------------------
# Kernel
# ---------------------------------------------------------------------------
def net_kernel(x_ref,                         # [T, 12]   bf16
               w1a_ref, w1b_ref,              # [12,120], [12,40]    bf16
               b1a_ref, b1b_ref,              # [1,120],  [1,40]     f32
               w2a_ref, w2b_ref,              # [120,200], [40,200]  bf16
               b2a_ref, b2b_ref,              # [1,200],  [1,200]    f32
               wf1a_ref, wf1b_ref, bf1_ref,   # [200,100]x2 bf16, [1,100] f32
               wf2_ref, bf2_ref,              # [100,128] bf16, [1,128] f32
               out_ref):                      # [T, 128]  f32
    f32 = jnp.float32
    bf16 = jnp.bfloat16
    x = x_ref[...]                                                   # bf16 [T,12]

    # layer 1: the two conv branches as two small matmuls, relu in f32
    h1 = jnp.maximum(
        jnp.dot(x, w1a_ref[...], preferred_element_type=f32) + b1a_ref[...], 0.0)
    h2 = jnp.maximum(
        jnp.dot(x, w1b_ref[...], preferred_element_type=f32) + b1b_ref[...], 0.0)

    # layer 2: conv2 / conv_2 as two dense matmuls (no block-diag zeros), tanh
    z1 = jnp.tanh(
        jnp.dot(h1.astype(bf16), w2a_ref[...], preferred_element_type=f32)
        + b2a_ref[...])                                              # [T,200]
    z2 = jnp.tanh(
        jnp.dot(h2.astype(bf16), w2b_ref[...], preferred_element_type=f32)
        + b2b_ref[...])                                              # [T,200]

    # fc1 with the concat folded into two partial matmuls, tanh
    p3 = (jnp.dot(z1.astype(bf16), wf1a_ref[...], preferred_element_type=f32)
          + jnp.dot(z2.astype(bf16), wf1b_ref[...], preferred_element_type=f32)
          + bf1_ref[...])                                            # [T,100]
    h3 = jnp.tanh(p3)

    # fc2, lane-dense padded to 128 output columns
    out_ref[...] = (
        jnp.dot(h3.astype(bf16), wf2_ref[...], preferred_element_type=f32)
        + bf2_ref[...])                                              # [T,128]


# ---------------------------------------------------------------------------
# Parameter construction / one-time expansion (outside the hot path)
# ---------------------------------------------------------------------------
def init_params(key):
    """Deterministic synthetic parameters matching the PyTorch shapes."""
    ks = jax.random.split(key, 12)
    p = {}
    p["conv1_w"] = jax.random.normal(ks[0], (20, 1, 2, 1), jnp.float32)
    p["conv1_b"] = 0.1 * jax.random.normal(ks[1], (20,), jnp.float32)
    p["conv2_w"] = jax.random.normal(ks[2], (200, 20, 1, 6), jnp.float32)
    p["conv2_b"] = 0.1 * jax.random.normal(ks[3], (200,), jnp.float32)
    p["conv_1_w"] = jax.random.normal(ks[4], (20, 1, 1, 6), jnp.float32)
    p["conv_1_b"] = 0.1 * jax.random.normal(ks[5], (20,), jnp.float32)
    p["conv_2_w"] = jax.random.normal(ks[6], (200, 20, 2, 1), jnp.float32)
    p["conv_2_b"] = 0.1 * jax.random.normal(ks[7], (200,), jnp.float32)
    p["fc1_w"] = jax.random.normal(ks[8], (100, 400), jnp.float32)
    p["fc1_b"] = 0.1 * jax.random.normal(ks[9], (100,), jnp.float32)
    p["fc2_w"] = jax.random.normal(ks[10], (2, 100), jnp.float32)
    p["fc2_b"] = 0.1 * jax.random.normal(ks[11], (2,), jnp.float32)
    return p


def expand_params(p):
    """Turn the tiny convs into dense matmul weights (bf16) + biases (f32).

    Call ONCE; the result is passed directly to net_forward so no expansion
    work happens per forward call.  Input feature index = h*6 + w.
    """
    f32 = jnp.float32
    bf16 = jnp.bfloat16

    # --- layer 1, branch 1: conv1 (2,1) -> out feature idx c*6 + w ------------
    w1a = jnp.einsum("ch,wv->hwcv",
                     p["conv1_w"][:, 0, :, 0], jnp.eye(6, dtype=f32)).reshape(12, 120)
    b1a = jnp.repeat(p["conv1_b"], 6).reshape(1, 120)
    # --- layer 1, branch 2: conv_1 (1,6) -> out feature idx c*2 + h -----------
    w1b = jnp.einsum("cw,hk->hwck",
                     p["conv_1_w"][:, 0, 0, :], jnp.eye(2, dtype=f32)).reshape(12, 40)
    b1b = jnp.repeat(p["conv_1_b"], 2).reshape(1, 40)

    # --- layer 2: conv2 (1,6) and conv_2 (2,1), kept as two DENSE matmuls -----
    w2a = jnp.transpose(p["conv2_w"][:, :, 0, :], (1, 2, 0)).reshape(120, 200)
    b2a = p["conv2_b"].reshape(1, 200)
    w2b = jnp.transpose(p["conv_2_w"][:, :, :, 0], (1, 2, 0)).reshape(40, 200)
    b2b = p["conv_2_b"].reshape(1, 200)

    # --- fc1 split by concat halves (branch1 -> rows 0:200, branch2 -> 200:400)
    wf1 = p["fc1_w"].T                                      # [400, 100]
    wf1a = wf1[:200]
    wf1b = wf1[200:]
    bf1 = p["fc1_b"].reshape(1, 100)

    # --- fc2, zero-padded to a lane-dense 128-wide output ---------------------
    wf2p = jnp.zeros((100, 128), f32).at[:, :2].set(p["fc2_w"].T)
    bf2p = jnp.zeros((1, 128), f32).at[:, :2].set(p["fc2_b"].reshape(1, 2))

    args = (w1a.astype(bf16), w1b.astype(bf16), b1a, b1b,
            w2a.astype(bf16), w2b.astype(bf16), b2a, b2b,
            wf1a.astype(bf16), wf1b.astype(bf16), bf1,
            wf2p.astype(bf16), bf2p)
    return tuple(jax.device_put(a) for a in args)


# ---------------------------------------------------------------------------
# Wrapper
# ---------------------------------------------------------------------------
def _round_up(x, m):
    return ((x + m - 1) // m) * m


def _cdiv(a, b):
    return (a + b - 1) // b


@functools.partial(jax.jit, static_argnames=("tile_n", "min_tiles"))
def net_forward(x_nchw, expanded, *, tile_n=512, min_tiles=2):
    """x_nchw: [N, 1, 2, 6]; expanded: output of expand_params(). Returns [N, 2] f32."""
    N = x_nchw.shape[0]
    if N == 0:
        return jnp.zeros((0, 2), jnp.float32)

    # bf16 input stream: halves the per-tile input DMA.
    x_flat = x_nchw.reshape(N, 12).astype(jnp.bfloat16)     # feature idx = h*6 + w

    # Tiling: choose the tile COUNT first (>= min_tiles so both v7x TensorCores
    # get work), then derive a 16-aligned tile -> padding waste stays bounded by
    # one 16-row group instead of up to a whole tile.
    n16 = _round_up(N, 16)
    num_tiles = max(min_tiles, _cdiv(n16, tile_n))
    tile = _round_up(_cdiv(n16, num_tiles), 16)
    n_pad = tile * num_tiles
    if n_pad != N:
        x_flat = jnp.pad(x_flat, ((0, n_pad - N), (0, 0)))

    (w1a, w1b, b1a, b1b, w2a, w2b, b2a, b2b,
     wf1a, wf1b, bf1, wf2p, bf2p) = expanded

    def const_spec(shape):
        # Full-array block, constant index map -> weights stay resident in VMEM.
        return pl.BlockSpec(shape, lambda i: (0, 0))

    out = pl.pallas_call(
        net_kernel,
        out_shape=jax.ShapeDtypeStruct((n_pad, 128), jnp.float32),
        grid=(num_tiles,),
        in_specs=[
            pl.BlockSpec((tile, 12), lambda i: (i, 0)),     # x: streamed per tile
            const_spec((12, 120)), const_spec((12, 40)),
            const_spec((1, 120)), const_spec((1, 40)),
            const_spec((120, 200)), const_spec((40, 200)),
            const_spec((1, 200)), const_spec((1, 200)),
            const_spec((200, 100)), const_spec((200, 100)), const_spec((1, 100)),
            const_spec((100, 128)), const_spec((1, 128)),
        ],
        out_specs=pl.BlockSpec((tile, 128), lambda i: (i, 0)),
        compiler_params=pltpu.CompilerParams(
            dimension_semantics=("parallel",)),             # megacore on v7x
    )(x_flat, w1a, w1b, b1a, b1b, w2a, w2b, b2a, b2b,
      wf1a, wf1b, bf1, wf2p, bf2p)

    return out[:N, :2]


# ---------------------------------------------------------------------------
# Pure-JAX references
# ---------------------------------------------------------------------------
def net_forward_reference(x_nchw, p):
    """Full-f32 replica of the PyTorch forward (semantic reference)."""
    x = x_nchw[:, 0].astype(jnp.float32)                       # [N, 2, 6]
    c1 = jax.nn.relu(jnp.einsum("nhw,ch->ncw", x, p["conv1_w"][:, 0, :, 0])
                     + p["conv1_b"][None, :, None])            # [N, 20, 6]
    c2 = jnp.tanh(jnp.einsum("ncw,ocw->no", c1, p["conv2_w"][:, :, 0, :])
                  + p["conv2_b"])                              # [N, 200]
    d1 = jax.nn.relu(jnp.einsum("nhw,cw->nch", x, p["conv_1_w"][:, 0, 0, :])
                     + p["conv_1_b"][None, :, None])           # [N, 20, 2]
    d2 = jnp.tanh(jnp.einsum("nch,och->no", d1, p["conv_2_w"][:, :, :, 0])
                  + p["conv_2_b"])                             # [N, 200]
    cat = jnp.concatenate([c2, d2], axis=1)                    # [N, 400]
    h3 = jnp.tanh(cat @ p["fc1_w"].T + p["fc1_b"])             # [N, 100]
    return h3 @ p["fc2_w"].T + p["fc2_b"]                      # [N, 2]


def net_forward_reference_bf16(x_nchw, p):
    """Reference with the SAME bf16-operand / f32-accumulate casts as the kernel."""
    bf16, f32 = jnp.bfloat16, jnp.float32
    x = x_nchw[:, 0].astype(bf16)                              # [N, 2, 6]
    c1 = jax.nn.relu(
        jnp.einsum("nhw,ch->ncw", x, p["conv1_w"][:, 0, :, 0].astype(bf16),
                   preferred_element_type=f32)
        + p["conv1_b"][None, :, None])
    c2 = jnp.tanh(
        jnp.einsum("ncw,ocw->no", c1.astype(bf16), p["conv2_w"][:, :, 0, :].astype(bf16),
                   preferred_element_type=f32) + p["conv2_b"])
    d1 = jax.nn.relu(
        jnp.einsum("nhw,cw->nch", x, p["conv_1_w"][:, 0, 0, :].astype(bf16),
                   preferred_element_type=f32)
        + p["conv_1_b"][None, :, None])
    d2 = jnp.tanh(
        jnp.einsum("nch,och->no", d1.astype(bf16), p["conv_2_w"][:, :, :, 0].astype(bf16),
                   preferred_element_type=f32) + p["conv_2_b"])
    cat = jnp.concatenate([c2, d2], axis=1)                    # [N, 400]
    h3 = jnp.tanh(
        jnp.einsum("nk,ok->no", cat.astype(bf16), p["fc1_w"].astype(bf16),
                   preferred_element_type=f32) + p["fc1_b"])
    return (jnp.einsum("nk,ok->no", h3.astype(bf16), p["fc2_w"].astype(bf16),
                       preferred_element_type=f32) + p["fc2_b"])


if __name__ == "__main__":
    key = jax.random.PRNGKey(0)
    k_x, k_x2, k_p = jax.random.split(key, 3)

    params = init_params(k_p)
    expanded = expand_params(params)        # one-time conv->matmul expansion

    # Small batch (2 tiles so the megacore path is exercised even when tiny).
    N = 8
    x = jax.random.normal(k_x, (N, 1, 2, 6), jnp.float32)
    out = jax.block_until_ready(net_forward(x, expanded))
    ref_b = net_forward_reference_bf16(x, params)
    ref_f = net_forward_reference(x, params)
    assert out.shape == (N, 2), out.shape
    # Exact-datapath check (same bf16 casts as the kernel).
    assert jnp.allclose(out, ref_b, rtol=1e-3, atol=1e-3)
    # Semantic sanity check vs full-f32 math (loose: bf16 operand rounding).
    assert jnp.allclose(out, ref_f, rtol=1e-1, atol=2.0)

    # Batch that is not a multiple of the tile (exercises padding path).
    N2 = 20
    x2 = jax.random.normal(k_x2, (N2, 1, 2, 6), jnp.float32)
    out2 = jax.block_until_ready(net_forward(x2, expanded))
    ref2_b = net_forward_reference_bf16(x2, params)
    ref2_f = net_forward_reference(x2, params)
    assert out2.shape == (N2, 2), out2.shape
    assert jnp.allclose(out2, ref2_b, rtol=1e-3, atol=1e-3)
    assert jnp.allclose(out2, ref2_f, rtol=1e-1, atol=2.0)

    print("KERNEL_OK")
</pallas_src>

<mosaic_0001>
module attributes {stable_mosaic.version = 11 : i64} {
  func.func @net_kernel(%arg0: i32, %arg1: memref<16x12xbf16, #tpu.memory_space<vmem>>, %arg2: memref<12x120xbf16, #tpu.memory_space<vmem>>, %arg3: memref<12x40xbf16, #tpu.memory_space<vmem>>, %arg4: memref<1x120xf32, #tpu.memory_space<vmem>>, %arg5: memref<1x40xf32, #tpu.memory_space<vmem>>, %arg6: memref<120x200xbf16, #tpu.memory_space<vmem>>, %arg7: memref<40x200xbf16, #tpu.memory_space<vmem>>, %arg8: memref<1x200xf32, #tpu.memory_space<vmem>>, %arg9: memref<1x200xf32, #tpu.memory_space<vmem>>, %arg10: memref<200x100xbf16, #tpu.memory_space<vmem>>, %arg11: memref<200x100xbf16, #tpu.memory_space<vmem>>, %arg12: memref<1x100xf32, #tpu.memory_space<vmem>>, %arg13: memref<100x128xbf16, #tpu.memory_space<vmem>>, %arg14: memref<1x128xf32, #tpu.memory_space<vmem>>, %arg15: memref<16x128xf32, #tpu.memory_space<vmem>>) attributes {dimension_semantics = [#tpu.dimension_semantics<parallel>], iteration_bounds = array<i64: 2>, scalar_prefetch = 0 : i64, scratch_operands = 0 : i64, tpu.core_type = #tpu.core_type<tc>, window_params = [{transform_indices = @transform_0, window_bounds = array<i64: 16, 12>}, {pipeline_mode = #tpu.pipeline_mode<synchronous>, transform_indices = @transform_1, window_bounds = array<i64: 12, 120>}, {pipeline_mode = #tpu.pipeline_mode<synchronous>, transform_indices = @transform_2, window_bounds = array<i64: 12, 40>}, {pipeline_mode = #tpu.pipeline_mode<synchronous>, transform_indices = @transform_3, window_bounds = array<i64: 1, 120>}, {pipeline_mode = #tpu.pipeline_mode<synchronous>, transform_indices = @transform_4, window_bounds = array<i64: 1, 40>}, {pipeline_mode = #tpu.pipeline_mode<synchronous>, transform_indices = @transform_5, window_bounds = array<i64: 120, 200>}, {pipeline_mode = #tpu.pipeline_mode<synchronous>, transform_indices = @transform_6, window_bounds = array<i64: 40, 200>}, {pipeline_mode = #tpu.pipeline_mode<synchronous>, transform_indices = @transform_7, window_bounds = array<i64: 1, 200>}, {pipeline_mode = #tpu.pipeline_mode<synchronous>, transform_indices = @transform_8, window_bounds = array<i64: 1, 200>}, {pipeline_mode = #tpu.pipeline_mode<synchronous>, transform_indices = @transform_9, window_bounds = array<i64: 200, 100>}, {pipeline_mode = #tpu.pipeline_mode<synchronous>, transform_indices = @transform_10, window_bounds = array<i64: 200, 100>}, {pipeline_mode = #tpu.pipeline_mode<synchronous>, transform_indices = @transform_11, window_bounds = array<i64: 1, 100>}, {pipeline_mode = #tpu.pipeline_mode<synchronous>, transform_indices = @transform_12, window_bounds = array<i64: 100, 128>}, {pipeline_mode = #tpu.pipeline_mode<synchronous>, transform_indices = @transform_13, window_bounds = array<i64: 1, 128>}, {transform_indices = @transform_14, window_bounds = array<i64: 16, 128>}]} {
    %c0 = arith.constant 0 : index
    %c0_0 = arith.constant 0 : index
    %0 = vector.load %arg1[%c0, %c0_0] : memref<16x12xbf16, #tpu.memory_space<vmem>>, vector<16x12xbf16>
    %c0_1 = arith.constant 0 : index
    %c0_2 = arith.constant 0 : index
    %1 = vector.load %arg2[%c0_1, %c0_2] : memref<12x120xbf16, #tpu.memory_space<vmem>>, vector<12x120xbf16>
    %cst = arith.constant dense<0.000000e+00> : vector<16x120xf32>
    %2 = tpu.matmul %0, %1, %cst {dimension_numbers = #tpu.dot_dimension_numbers<[1], [0], [0], [1], [0, 0, 1, 1], [], []>} : vector<16x12xbf16>, vector<12x120xbf16>, vector<16x120xf32> -> vector<16x120xf32>
    %c0_3 = arith.constant 0 : index
    %c0_4 = arith.constant 0 : index
    %3 = vector.load %arg4[%c0_3, %c0_4] : memref<1x120xf32, #tpu.memory_space<vmem>>, vector<1x120xf32>
    %4 = vector.broadcast %3 : vector<1x120xf32> to vector<16x120xf32>
    %5 = arith.addf %2, %4 : vector<16x120xf32>
    %cst_5 = arith.constant 0.000000e+00 : f32
    %6 = vector.broadcast %cst_5 : f32 to vector<16x120xf32>
    %7 = arith.maximumf %5, %6 : vector<16x120xf32>
    %c0_6 = arith.constant 0 : index
    %c0_7 = arith.constant 0 : index
    %8 = vector.load %arg3[%c0_6, %c0_7] : memref<12x40xbf16, #tpu.memory_space<vmem>>, vector<12x40xbf16>
    %cst_8 = arith.constant dense<0.000000e+00> : vector<16x40xf32>
    %9 = tpu.matmul %0, %8, %cst_8 {dimension_numbers = #tpu.dot_dimension_numbers<[1], [0], [0], [1], [0, 0, 1, 1], [], []>} : vector<16x12xbf16>, vector<12x40xbf16>, vector<16x40xf32> -> vector<16x40xf32>
    %c0_9 = arith.constant 0 : index
    %c0_10 = arith.constant 0 : index
    %10 = vector.load %arg5[%c0_9, %c0_10] : memref<1x40xf32, #tpu.memory_space<vmem>>, vector<1x40xf32>
    %11 = vector.broadcast %10 : vector<1x40xf32> to vector<16x40xf32>
    %12 = arith.addf %9, %11 : vector<16x40xf32>
    %cst_11 = arith.constant 0.000000e+00 : f32
    %13 = vector.broadcast %cst_11 : f32 to vector<16x40xf32>
    %14 = arith.maximumf %12, %13 : vector<16x40xf32>
    %15 = arith.truncf %7 : vector<16x120xf32> to vector<16x120xbf16>
    %c0_12 = arith.constant 0 : index
    %c0_13 = arith.constant 0 : index
    %16 = vector.load %arg6[%c0_12, %c0_13] : memref<120x200xbf16, #tpu.memory_space<vmem>>, vector<120x200xbf16>
    %cst_14 = arith.constant dense<0.000000e+00> : vector<16x200xf32>
    %17 = tpu.matmul %15, %16, %cst_14 {dimension_numbers = #tpu.dot_dimension_numbers<[1], [0], [0], [1], [0, 0, 1, 1], [], []>} : vector<16x120xbf16>, vector<120x200xbf16>, vector<16x200xf32> -> vector<16x200xf32>
    %c0_15 = arith.constant 0 : index
    %c0_16 = arith.constant 0 : index
    %18 = vector.load %arg8[%c0_15, %c0_16] : memref<1x200xf32, #tpu.memory_space<vmem>>, vector<1x200xf32>
    %19 = vector.broadcast %18 : vector<1x200xf32> to vector<16x200xf32>
    %20 = arith.addf %17, %19 : vector<16x200xf32>
    %21 = math.tanh %20 : vector<16x200xf32>
    %22 = arith.truncf %14 : vector<16x40xf32> to vector<16x40xbf16>
    %c0_17 = arith.constant 0 : index
    %c0_18 = arith.constant 0 : index
    %23 = vector.load %arg7[%c0_17, %c0_18] : memref<40x200xbf16, #tpu.memory_space<vmem>>, vector<40x200xbf16>
    %cst_19 = arith.constant dense<0.000000e+00> : vector<16x200xf32>
    %24 = tpu.matmul %22, %23, %cst_19 {dimension_numbers = #tpu.dot_dimension_numbers<[1], [0], [0], [1], [0, 0, 1, 1], [], []>} : vector<16x40xbf16>, vector<40x200xbf16>, vector<16x200xf32> -> vector<16x200xf32>
    %c0_20 = arith.constant 0 : index
    %c0_21 = arith.constant 0 : index
    %25 = vector.load %arg9[%c0_20, %c0_21] : memref<1x200xf32, #tpu.memory_space<vmem>>, vector<1x200xf32>
    %26 = vector.broadcast %25 : vector<1x200xf32> to vector<16x200xf32>
    %27 = arith.addf %24, %26 : vector<16x200xf32>
    %28 = math.tanh %27 : vector<16x200xf32>
    %29 = arith.truncf %21 : vector<16x200xf32> to vector<16x200xbf16>
    %c0_22 = arith.constant 0 : index
    %c0_23 = arith.constant 0 : index
    %30 = vector.load %arg10[%c0_22, %c0_23] : memref<200x100xbf16, #tpu.memory_space<vmem>>, vector<200x100xbf16>
    %cst_24 = arith.constant dense<0.000000e+00> : vector<16x100xf32>
    %31 = tpu.matmul %29, %30, %cst_24 {dimension_numbers = #tpu.dot_dimension_numbers<[1], [0], [0], [1], [0, 0, 1, 1], [], []>} : vector<16x200xbf16>, vector<200x100xbf16>, vector<16x100xf32> -> vector<16x100xf32>
    %32 = arith.truncf %28 : vector<16x200xf32> to vector<16x200xbf16>
    %c0_25 = arith.constant 0 : index
    %c0_26 = arith.constant 0 : index
    %33 = vector.load %arg11[%c0_25, %c0_26] : memref<200x100xbf16, #tpu.memory_space<vmem>>, vector<200x100xbf16>
    %cst_27 = arith.constant dense<0.000000e+00> : vector<16x100xf32>
    %34 = tpu.matmul %32, %33, %cst_27 {dimension_numbers = #tpu.dot_dimension_numbers<[1], [0], [0], [1], [0, 0, 1, 1], [], []>} : vector<16x200xbf16>, vector<200x100xbf16>, vector<16x100xf32> -> vector<16x100xf32>
    %35 = arith.addf %31, %34 : vector<16x100xf32>
    %c0_28 = arith.constant 0 : index
    %c0_29 = arith.constant 0 : index
    %36 = vector.load %arg12[%c0_28, %c0_29] : memref<1x100xf32, #tpu.memory_space<vmem>>, vector<1x100xf32>
    %37 = vector.broadcast %36 : vector<1x100xf32> to vector<16x100xf32>
    %38 = arith.addf %35, %37 : vector<16x100xf32>
    %39 = math.tanh %38 : vector<16x100xf32>
    %40 = arith.truncf %39 : vector<16x100xf32> to vector<16x100xbf16>
    %c0_30 = arith.constant 0 : index
    %c0_31 = arith.constant 0 : index
    %41 = vector.load %arg13[%c0_30, %c0_31] : memref<100x128xbf16, #tpu.memory_space<vmem>>, vector<100x128xbf16>
    %cst_32 = arith.constant dense<0.000000e+00> : vector<16x128xf32>
    %42 = tpu.matmul %40, %41, %cst_32 {dimension_numbers = #tpu.dot_dimension_numbers<[1], [0], [0], [1], [0, 0, 1, 1], [], []>} : vector<16x100xbf16>, vector<100x128xbf16>, vector<16x128xf32> -> vector<16x128xf32>
    %c0_33 = arith.constant 0 : index
    %c0_34 = arith.constant 0 : index
    %43 = vector.load %arg14[%c0_33, %c0_34] : memref<1x128xf32, #tpu.memory_space<vmem>>, vector<1x128xf32>
    %44 = vector.broadcast %43 : vector<1x128xf32> to vector<16x128xf32>
    %45 = arith.addf %42, %44 : vector<16x128xf32>
    %c0_35 = arith.constant 0 : index
    %c0_36 = arith.constant 0 : index
    %46 = vector.load %arg15[%c0_35, %c0_36] : memref<16x128xf32, #tpu.memory_space<vmem>>, vector<16x128xf32>
    tpu.vector_store %arg15[%c0_35, %c0_36], %45 {strides = array<i32>} : memref<16x128xf32, #tpu.memory_space<vmem>>, vector<16x128xf32>,
    return
  }
  func.func @transform_0(%arg0: i32) -> (i32, i32) {
    %c0_i32 = arith.constant 0 : i32
    %c0_i32_0 = arith.constant 0 : i32
    return %arg0, %c0_i32 : i32, i32
  }
  func.func @transform_1(%arg0: i32) -> (i32, i32) {
    %c0_i32 = arith.constant 0 : i32
    %c0_i32_0 = arith.constant 0 : i32
    %c0_i32_1 = arith.constant 0 : i32
    return %c0_i32, %c0_i32_0 : i32, i32
  }
  func.func @transform_2(%arg0: i32) -> (i32, i32) {
    %c0_i32 = arith.constant 0 : i32
    %c0_i32_0 = arith.constant 0 : i32
    %c0_i32_1 = arith.constant 0 : i32
    return %c0_i32, %c0_i32_0 : i32, i32
  }
  func.func @transform_3(%arg0: i32) -> (i32, i32) {
    %c0_i32 = arith.constant 0 : i32
    %c0_i32_0 = arith.constant 0 : i32
    %c0_i32_1 = arith.constant 0 : i32
    return %c0_i32, %c0_i32_0 : i32, i32
  }
  func.func @transform_4(%arg0: i32) -> (i32, i32) {
    %c0_i32 = arith.constant 0 : i32
    %c0_i32_0 = arith.constant 0 : i32
    %c0_i32_1 = arith.constant 0 : i32
    return %c0_i32, %c0_i32_0 : i32, i32
  }
  func.func @transform_5(%arg0: i32) -> (i32, i32) {
    %c0_i32 = arith.constant 0 : i32
    %c0_i32_0 = arith.constant 0 : i32
    %c0_i32_1 = arith.constant 0 : i32
    return %c0_i32, %c0_i32_0 : i32, i32
  }
  func.func @transform_6(%arg0: i32) -> (i32, i32) {
    %c0_i32 = arith.constant 0 : i32
    %c0_i32_0 = arith.constant 0 : i32
    %c0_i32_1 = arith.constant 0 : i32
    return %c0_i32, %c0_i32_0 : i32, i32
  }
  func.func @transform_7(%arg0: i32) -> (i32, i32) {
    %c0_i32 = arith.constant 0 : i32
    %c0_i32_0 = arith.constant 0 : i32
    %c0_i32_1 = arith.constant 0 : i32
    return %c0_i32, %c0_i32_0 : i32, i32
  }
  func.func @transform_8(%arg0: i32) -> (i32, i32) {
    %c0_i32 = arith.constant 0 : i32
    %c0_i32_0 = arith.constant 0 : i32
    %c0_i32_1 = arith.constant 0 : i32
    return %c0_i32, %c0_i32_0 : i32, i32
  }
  func.func @transform_9(%arg0: i32) -> (i32, i32) {
    %c0_i32 = arith.constant 0 : i32
    %c0_i32_0 = arith.constant 0 : i32
    %c0_i32_1 = arith.constant 0 : i32
    return %c0_i32, %c0_i32_0 : i32, i32
  }
  func.func @transform_10(%arg0: i32) -> (i32, i32) {
    %c0_i32 = arith.constant 0 : i32
    %c0_i32_0 = arith.constant 0 : i32
    %c0_i32_1 = arith.constant 0 : i32
    return %c0_i32, %c0_i32_0 : i32, i32
  }
  func.func @transform_11(%arg0: i32) -> (i32, i32) {
    %c0_i32 = arith.constant 0 : i32
    %c0_i32_0 = arith.constant 0 : i32
    %c0_i32_1 = arith.constant 0 : i32
    return %c0_i32, %c0_i32_0 : i32, i32
  }
  func.func @transform_12(%arg0: i32) -> (i32, i32) {
    %c0_i32 = arith.constant 0 : i32
    %c0_i32_0 = arith.constant 0 : i32
    %c0_i32_1 = arith.constant 0 : i32
    return %c0_i32, %c0_i32_0 : i32, i32
  }
  func.func @transform_13(%arg0: i32) -> (i32, i32) {
    %c0_i32 = arith.constant 0 : i32
    %c0_i32_0 = arith.constant 0 : i32
    %c0_i32_1 = arith.constant 0 : i32
    return %c0_i32, %c0_i32_0 : i32, i32
  }
  func.func @transform_14(%arg0: i32) -> (i32, i32) {
    %c0_i32 = arith.constant 0 : i32
    %c0_i32_0 = arith.constant 0 : i32
    return %arg0, %c0_i32 : i32, i32
  }
}

</mosaic_0001>

<llo_original>
// kernel: net_forward.1
$region0: #{net_forward.1}
  #allocation0 [shape = 'u32[]', space=smem, size = 0x4, offset = 0x4, fixed_abs, tag = 'smem constant byte address 0x4 - core index']
  #allocation1 [shape = 'u32[144,128]{1,0:T(1,128)}', space=vmem, size = 0x12000, scoped, tag = 'internal scratch']
  %s0 = inlined_call_operand.vmem [shape: bf16[32,12], index: 0, kind: input, shape index: {}]
  %s1 = inlined_call_operand.hbm [shape: bf16[12,120], index: 1, kind: input, shape index: {}]
  %s2 = inlined_call_operand.hbm [shape: bf16[12,40], index: 2, kind: input, shape index: {}]
  %s3 = inlined_call_operand.hbm [shape: f32[1,120], index: 3, kind: input, shape index: {}]
  %s4 = inlined_call_operand.vmem [shape: f32[1,40], index: 4, kind: input, shape index: {}]
  %s5 = inlined_call_operand.vmem [shape: bf16[120,200], index: 5, kind: input, shape index: {}]
  %s6 = inlined_call_operand.vmem [shape: bf16[40,200], index: 6, kind: input, shape index: {}]
  %s7 = inlined_call_operand.vmem [shape: f32[1,200], index: 7, kind: input, shape index: {}]
  %s8 = inlined_call_operand.vmem [shape: f32[1,200], index: 8, kind: input, shape index: {}]
  %s9 = inlined_call_operand.vmem [shape: bf16[200,100], index: 9, kind: input, shape index: {}]
  %s10 = inlined_call_operand.vmem [shape: bf16[200,100], index: 10, kind: input, shape index: {}]
  %s11 = inlined_call_operand.vmem [shape: f32[1,100], index: 11, kind: input, shape index: {}]
  %s12 = inlined_call_operand.vmem [shape: bf16[100,128], index: 12, kind: input, shape index: {}]
  %s13 = inlined_call_operand.vmem [shape: f32[1,128], index: 13, kind: input, shape index: {}]
  %s14 = inlined_call_operand.vmem [shape: f32[32,128], index: 14, kind: output, shape index: {}]
  %s15 = sld [smem:[#allocation0]]
  $region101: #{net_forward.1} parent=0
    _
  %s17 = ssub.s32 1, %s15
  %s18 = scalar_select 0, %s17, %s15
  $region1: #{net_forward.1} parent=0
    #allocation2 [shape = 'u8[4096]{0}', space=vmem, size = 0x1000, scoped, tag = 'input window, operand 1, single buffered']
    #allocation3 [shape = 's32[2]{0}', space=sflag, size = 0x8, scoped, tag = 'scoped memory for net_forward.1']
    #allocation4 [shape = 'u8[4096]{0}', space=vmem, size = 0x1000, scoped, tag = 'input window, operand 2, single buffered']
    #allocation5 [shape = 's32[1]{0}', space=sflag, size = 0x4, scoped, tag = 'scoped memory for net_forward.1']
    #allocation6 [shape = 'u8[512]{0}', space=vmem, size = 0x400, scoped, tag = 'input window, operand 3, single buffered']
    %19 = vsyncpa [#allocation3], 0
    %20 = vsyncpa [#allocation5], 0
    loop: start=0, step=1, limit=4
    $region2: #{net_forward.1} parent=1 // loop_pre_header
      _
    $region3: #{net_forward.1} parent=1 // loop_header
      %s22 = sphi 0, %s26
      %p23 = scmp.ge.s32.totalorder %s22, 4
      %s32 = sphi 0, %s34
      %s35 = sphi 0, %s32
      %s36 = sphi 0, %s35
      %s52 = sphi 0, %s36
      %s56 = sphi 0, %s56
      %s58 = sphi 0, %s56
      %s59 = sphi 0, %s58
      %s73 = sphi 0, %s59
      %s77 = sphi 0, %s77
      %s79 = sphi 0, %s77
      %s80 = sphi 0, %s79
      %s94 = sphi 0, %s80
      %s98 = sphi 0, %s98
      %s100 = sphi 0, %s98
      %s101 = sphi 0, %s100
      %s115 = sphi 0, %s101
      %s119 = sphi 0, %s119
      %s121 = sphi 0, %s119
      %s122 = sphi 0, %s121
      %s136 = sphi 0, %s122
      %s140 = sphi 0, %s140
      %s142 = sphi 0, %s140
      %s143 = sphi 0, %s142
      %s157 = sphi 0, %s143
      %s161 = sphi 0, %s161
      %s163 = sphi 0, %s161
      %s164 = sphi 0, %s163
      %s178 = sphi 0, %s164
      %s182 = sphi 0, %s182
      %s184 = sphi 0, %s182
      %s185 = sphi 0, %s184
      %s199 = sphi 0, %s185
      %s203 = sphi 0, %s203
      %s205 = sphi 0, %s203
      %s206 = sphi 0, %s205
      %s220 = sphi 0, %s206
      %s224 = sphi 0, %s224
      %s226 = sphi 0, %s224
      %s227 = sphi 0, %s226
      %s241 = sphi 0, %s227
      %s245 = sphi 0, %s245
      %s247 = sphi 0, %s245
      %s248 = sphi 0, %s247
      %s262 = sphi 0, %s248
      %s266 = sphi 0, %s266
      %s268 = sphi 0, %s266
      %s269 = sphi 0, %s268
      %s283 = sphi 0, %s269
      %s287 = sphi 0, %s287
      %s289 = sphi 0, %s287
      %s290 = sphi 0, %s289
      %s304 = sphi 0, %s290
      %s308 = sphi 0, %s308
      %s310 = sphi 0, %s308
      %s311 = sphi 0, %s310
      %s325 = sphi 0, %s311
      %s331 = sphi 0, %s333
      %s334 = sphi 0, %s331
      %s335 = sphi 0, %s334
      %s351 = sphi 0, %s335
    $region4: #{net_forward.1} parent=1 // loop_header_branch
      %25 = sbr.rel (%p23) target = $region8
    $region5: #{net_forward.1} parent=1 // loop_body
      %s27 = ssub.s32 %s22, 1
      %s28 = ssub.s32 %s22, 2
      %s29 = sadd.s32 %s22, 1
      %s30 = ssub.s32 %s22, %s29
      %p31 = scmp.eq.s32.totalorder %s30, 0
      %s33 = sadd.s32 %s32, 1
      %s34 = scalar_select %p31, %s32, %s33
      %p37 = pneg %p31
      %p38 = scmp.eq.s32.totalorder %s22, 1
      %p39 = por %p37, %p38
      %p40 = scmp.ne.s32.totalorder %s32, %s35
      %p41 = scmp.eq.s32.totalorder %s22, 0
      %p42 = por %p40, %p41
      %p43 = scmp.ne.s32.totalorder %s32, %s35
      %p44 = scmp.eq.s32.totalorder %s27, 1
      %p45 = por %p43, %p44
      %p46 = scmp.ne.s32.totalorder %s35, %s36
      %p47 = scmp.eq.s32.totalorder %s27, 0
      %p48 = por %p46, %p47
      %p49 = scmp.ne.s32.totalorder %s35, %s36
      %p50 = scmp.eq.s32.totalorder %s28, 1
      %p51 = por %p49, %p50
      %p53 = scmp.ne.s32.totalorder %s36, %s52
      %p54 = scmp.eq.s32.totalorder %s28, 0
      %p55 = por %p53, %p54
      %s57 = sadd.s32 %s56, 1
      %p60 = scmp.eq.s32.totalorder %s22, 1
      %p61 = scmp.ne.s32.totalorder %s56, %s58
      %p62 = scmp.eq.s32.totalorder %s22, 0
      %p63 = por %p61, %p62
      %p64 = scmp.ne.s32.totalorder %s56, %s58
      %p65 = scmp.eq.s32.totalorder %s27, 1
      %p66 = por %p64, %p65
      %p67 = scmp.ne.s32.totalorder %s58, %s59
      %p68 = scmp.eq.s32.totalorder %s27, 0
      %p69 = por %p67, %p68
      %p70 = scmp.ne.s32.totalorder %s58, %s59
      %p71 = scmp.eq.s32.totalorder %s28, 1
      %p72 = por %p70, %p71
      %p74 = scmp.ne.s32.totalorder %s59, %s73
      %p75 = scmp.eq.s32.totalorder %s28, 0
      %p76 = por %p74, %p75
      %s78 = sadd.s32 %s77, 1
      %p81 = scmp.eq.s32.totalorder %s22, 1
      %p82 = scmp.ne.s32.totalorder %s77, %s79
      %p83 = scmp.eq.s32.totalorder %s22, 0
      %p84 = por %p82, %p83
      %p85 = scmp.ne.s32.totalorder %s77, %s79
      %p86 = scmp.eq.s32.totalorder %s27, 1
      %p87 = por %p85, %p86
      %p88 = scmp.ne.s32.totalorder %s79, %s80
      %p89 = scmp.eq.s32.totalorder %s27, 0
      %p90 = por %p88, %p89
      %p91 = scmp.ne.s32.totalorder %s79, %s80
      %p92 = scmp.eq.s32.totalorder %s28, 1
      %p93 = por %p91, %p92
      %p95 = scmp.ne.s32.totalorder %s80, %s94
      %p96 = scmp.eq.s32.totalorder %s28, 0
      %p97 = por %p95, %p96
      %s99 = sadd.s32 %s98, 1
      %p102 = scmp.eq.s32.totalorder %s22, 1
      %p103 = scmp.ne.s32.totalorder %s98, %s100
      %p104 = scmp.eq.s32.totalorder %s22, 0
      %p105 = por %p103, %p104
      %p106 = scmp.ne.s32.totalorder %s98, %s100
      %p107 = scmp.eq.s32.totalorder %s27, 1
      %p108 = por %p106, %p107
      %p109 = scmp.ne.s32.totalorder %s100, %s101
      %p110 = scmp.eq.s32.totalorder %s27, 0
      %p111 = por %p109, %p110
      %p112 = scmp.ne.s32.totalorder %s100, %s101
      %p113 = scmp.eq.s32.totalorder %s28, 1
      %p114 = por %p112, %p113
      %p116 = scmp.ne.s32.totalorder %s101, %s115
      %p117 = scmp.eq.s32.totalorder %s28, 0
      %p118 = por %p116, %p117
      %s120 = sadd.s32 %s119, 1
      %p123 = scmp.eq.s32.totalorder %s22, 1
      %p124 = scmp.ne.s32.totalorder %s119, %s121
      %p125 = scmp.eq.s32.totalorder %s22, 0
      %p126 = por %p124, %p125
      %p127 = scmp.ne.s32.totalorder %s119, %s121
      %p128 = scmp.eq.s32.totalorder %s27, 1
      %p129 = por %p127, %p128
      %p130 = scmp.ne.s32.totalorder %s121, %s122
      %p131 = scmp.eq.s32.totalorder %s27, 0
      %p132 = por %p130, %p131
      %p133 = scmp.ne.s32.totalorder %s121, %s122
      %p134 = scmp.eq.s32.totalorder %s28, 1
      %p135 = por %p133, %p134
      %p137 = scmp.ne.s32.totalorder %s122, %s136
      %p138 = scmp.eq.s32.totalorder %s28, 0
      %p139 = por %p137, %p138
      %s141 = sadd.s32 %s140, 1
      %p144 = scmp.eq.s32.totalorder %s22, 1
      %p145 = scmp.ne.s32.totalorder %s140, %s142
      %p146 = scmp.eq.s32.totalorder %s22, 0
      %p147 = por %p145, %p146
      %p148 = scmp.ne.s32.totalorder %s140, %s142
      %p149 = scmp.eq.s32.totalorder %s27, 1
      %p150 = por %p148, %p149
      %p151 = scmp.ne.s32.totalorder %s142, %s143
      %p152 = scmp.eq.s32.totalorder %s27, 0
      %p153 = por %p151, %p152
      %p154 = scmp.ne.s32.totalorder %s142, %s143
      %p155 = scmp.eq.s32.totalorder %s28, 1
      %p156 = por %p154, %p155
      %p158 = scmp.ne.s32.totalorder %s143, %s157
      %p159 = scmp.eq.s32.totalorder %s28, 0
      %p160 = por %p158, %p159
      %s162 = sadd.s32 %s161, 1
      %p165 = scmp.eq.s32.totalorder %s22, 1
      %p166 = scmp.ne.s32.totalorder %s161, %s163
      %p167 = scmp.eq.s32.totalorder %s22, 0
      %p168 = por %p166, %p167
      %p169 = scmp.ne.s32.totalorder %s161, %s163
      %p170 = scmp.eq.s32.totalorder %s27, 1
      %p171 = por %p169, %p170
      %p172 = scmp.ne.s32.totalorder %s163, %s164
      %p173 = scmp.eq.s32.totalorder %s27, 0
      %p174 = por %p172, %p173
      %p175 = scmp.ne.s32.totalorder %s163, %s164
      %p176 = scmp.eq.s32.totalorder %s28, 1
      %p177 = por %p175, %p176
      %p179 = scmp.ne.s32.totalorder %s164, %s178
      %p180 = scmp.eq.s32.totalorder %s28, 0
      %p181 = por %p179, %p180
      %s183 = sadd.s32 %s182, 1
      %p186 = scmp.eq.s32.totalorder %s22, 1
      %p187 = scmp.ne.s32.totalorder %s182, %s184
      %p188 = scmp.eq.s32.totalorder %s22, 0
      %p189 = por %p187, %p188
      %p190 = scmp.ne.s32.totalorder %s182, %s184
      %p191 = scmp.eq.s32.totalorder %s27, 1
      %p192 = por %p190, %p191
      %p193 = scmp.ne.s32.totalorder %s184, %s185
      %p194 = scmp.eq.s32.totalorder %s27, 0
      %p195 = por %p193, %p194
      %p196 = scmp.ne.s32.totalorder %s184, %s185
      %p197 = scmp.eq.s32.totalorder %s28, 1
      %p198 = por %p196, %p197
      %p200 = scmp.ne.s32.totalorder %s185, %s199
      %p201 = scmp.eq.s32.totalorder %s28, 0
      %p202 = por %p200, %p201
      %s204 = sadd.s32 %s203, 1
      %p207 = scmp.eq.s32.totalorder %s22, 1
      %p208 = scmp.ne.s32.totalorder %s203, %s205
      %p209 = scmp.eq.s32.totalorder %s22, 0
      %p210 = por %p208, %p209
      %p211 = scmp.ne.s32.totalorder %s203, %s205
      %p212 = scmp.eq.s32.totalorder %s27, 1
      %p213 = por %p211, %p212
      %p214 = scmp.ne.s32.totalorder %s205, %s206
      %p215 = scmp.eq.s32.totalorder %s27, 0
      %p216 = por %p214, %p215
      %p217 = scmp.ne.s32.totalorder %s205, %s206
      %p218 = scmp.eq.s32.totalorder %s28, 1
      %p219 = por %p217, %p218
      %p221 = scmp.ne.s32.totalorder %s206, %s220
      %p222 = scmp.eq.s32.totalorder %s28, 0
      %p223 = por %p221, %p222
      %s225 = sadd.s32 %s224, 1
      %p228 = scmp.eq.s32.totalorder %s22, 1
      %p229 = scmp.ne.s32.totalorder %s224, %s226
      %p230 = scmp.eq.s32.totalorder %s22, 0
      %p231 = por %p229, %p230
      %p232 = scmp.ne.s32.totalorder %s224, %s226
      %p233 = scmp.eq.s32.totalorder %s27, 1
      %p234 = por %p232, %p233
      %p235 = scmp.ne.s32.totalorder %s226, %s227
      %p236 = scmp.eq.s32.totalorder %s27, 0
      %p237 = por %p235, %p236
      %p238 = scmp.ne.s32.totalorder %s226, %s227
      %p239 = scmp.eq.s32.totalorder %s28, 1
      %p240 = por %p238, %p239
      %p242 = scmp.ne.s32.totalorder %s227, %s241
      %p243 = scmp.eq.s32.totalorder %s28, 0
      %p244 = por %p242, %p243
      %s246 = sadd.s32 %s245, 1
      %p249 = scmp.eq.s32.totalorder %s22, 1
      %p250 = scmp.ne.s32.totalorder %s245, %s247
      %p251 = scmp.eq.s32.totalorder %s22, 0
      %p252 = por %p250, %p251
      %p253 = scmp.ne.s32.totalorder %s245, %s247
      %p254 = scmp.eq.s32.totalorder %s27, 1
      %p255 = por %p253, %p254
      %p256 = scmp.ne.s32.totalorder %s247, %s248
      %p257 = scmp.eq.s32.totalorder %s27, 0
      %p258 = por %p256, %p257
      %p259 = scmp.ne.s32.totalorder %s247, %s248
      %p260 = scmp.eq.s32.totalorder %s28, 1
      %p261 = por %p259, %p260
      %p263 = scmp.ne.s32.totalorder %s248, %s262
      %p264 = scmp.eq.s32.totalorder %s28, 0
      %p265 = por %p263, %p264
      %s267 = sadd.s32 %s266, 1
      %p270 = scmp.eq.s32.totalorder %s22, 1
      %p271 = scmp.ne.s32.totalorder %s266, %s268
      %p272 = scmp.eq.s32.totalorder %s22, 0
      %p273 = por %p271, %p272
      %p274 = scmp.ne.s32.totalorder %s266, %s268
      %p275 = scmp.eq.s32.totalorder %s27, 1
      %p276 = por %p274, %p275
      %p277 = scmp.ne.s32.totalorder %s268, %s269
      %p278 = scmp.eq.s32.totalorder %s27, 0
      %p279 = por %p277, %p278
      %p280 = scmp.ne.s32.totalorder %s268, %s269
      %p281 = scmp.eq.s32.totalorder %s28, 1
      %p282 = por %p280, %p281
      %p284 = scmp.ne.s32.totalorder %s269, %s283
      %p285 = scmp.eq.s32.totalorder %s28, 0
      %p286 = por %p284, %p285
      %s288 = sadd.s32 %s287, 1
      %p291 = scmp.eq.s32.totalorder %s22, 1
      %p292 = scmp.ne.s32.totalorder %s287, %s289
      %p293 = scmp.eq.s32.totalorder %s22, 0
      %p294 = por %p292, %p293
      %p295 = scmp.ne.s32.totalorder %s287, %s289
      %p296 = scmp.eq.s32.totalorder %s27, 1
      %p297 = por %p295, %p296
      %p298 = scmp.ne.s32.totalorder %s289, %s290
      %p299 = scmp.eq.s32.totalorder %s27, 0
      %p300 = por %p298, %p299
      %p301 = scmp.ne.s32.totalorder %s289, %s290
      %p302 = scmp.eq.s32.totalorder %s28, 1
      %p303 = por %p301, %p302
      %p305 = scmp.ne.s32.totalorder %s290, %s304
      %p306 = scmp.eq.s32.totalorder %s28, 0
      %p307 = por %p305, %p306
      %s309 = sadd.s32 %s308, 1
      %p312 = scmp.eq.s32.totalorder %s22, 1
      %p313 = scmp.ne.s32.totalorder %s308, %s310
      %p314 = scmp.eq.s32.totalorder %s22, 0
      %p315 = por %p313, %p314
      %p316 = scmp.ne.s32.totalorder %s308, %s310
      %p317 = scmp.eq.s32.totalorder %s27, 1
      %p318 = por %p316, %p317
      %p319 = scmp.ne.s32.totalorder %s310, %s311
      %p320 = scmp.eq.s32.totalorder %s27, 0
      %p321 = por %p319, %p320
      %p322 = scmp.ne.s32.totalorder %s310, %s311
      %p323 = scmp.eq.s32.totalorder %s28, 1
      %p324 = por %p322, %p323
      %p326 = scmp.ne.s32.totalorder %s311, %s325
      %p327 = scmp.eq.s32.totalorder %s28, 0
      %p328 = por %p326, %p327
      %s329 = ssub.s32 %s22, %s29
      %p330 = scmp.eq.s32.totalorder %s329, 0
      %s332 = sadd.s32 %s331, 1
      %s333 = scalar_select %p330, %s331, %s332
      %p336 = pneg %p330
      %p337 = scmp.eq.s32.totalorder %s22, 1
      %p338 = por %p336, %p337
      %p339 = scmp.ne.s32.totalorder %s331, %s334
      %p340 = scmp.eq.s32.totalorder %s22, 0
      %p341 = por %p339, %p340
      %p342 = scmp.ne.s32.totalorder %s331, %s334
      %p343 = scmp.eq.s32.totalorder %s27, 1
      %p344 = por %p342, %p343
      %p345 = scmp.ne.s32.totalorder %s334, %s335
      %p346 = scmp.eq.s32.totalorder %s27, 0
      %p347 = por %p345, %p346
      %p348 = scmp.ne.s32.totalorder %s334, %s335
      %p349 = scmp.eq.s32.totalorder %s28, 1
      %p350 = por %p348, %p349
      %p352 = scmp.ne.s32.totalorder %s335, %s351
      %p353 = scmp.eq.s32.totalorder %s28, 0
      %p354 = por %p352, %p353
      %p355 = scmp.le.s32.totalorder 1, %s22
      %p356 = scmp.lt.s32.totalorder %s22, 3
      %p357 = pnand %p355, %p356
      %p358 = pneg %p357
      // Predicated region
      $region9: #{net_forward.1} parent=5 // pred_check
        _
      $region10: #{net_forward.1} parent=5 // pred_check_branch
        %360 = sbr.rel (%p357) target = $region12
      $region11: #{net_forward.1} parent=5 // pred_region
        %s361 = ssub.s32 %s22, 1
        // Predicated region
        $region13: #{net_forward.1} parent=11 // pred_check
          %p362 = pneg %p69
        $region14: #{net_forward.1} parent=11 // pred_check_branch
          %364 = sbr.rel (%p362) target = $region16
        $region15: #{net_forward.1} parent=11 // pred_region
          %s366 = ssub.s32 128, 128
          %367 = vsyncadd [#allocation3], %s366
          %s368 = sshll.u32 [#allocation2], 4
          %s369 = int_to_ptr.vmem [resolvable:$true] %s368
          %374 = dma.hbm_to_vmem [thread:$0]  %s1, 128, %s369, [#allocation3], 64, 64, 4
        $region16: #{net_forward.1} parent=11 // pred_fallthru
          _
        // Predicated region
        $region17: #{net_forward.1} parent=11 // pred_check
          %p375 = pneg %p90
        $region18: #{net_forward.1} parent=11 // pred_check_branch
          %377 = sbr.rel (%p375) target = $region20
        $region19: #{net_forward.1} parent=11 // pred_region
          %s379 = ssub.s32 128, 128
          %380 = vsyncadd [#allocation5], %s379
          %s381 = sshll.u32 [#allocation4], 4
          %s382 = int_to_ptr.vmem [resolvable:$true] %s381
          %387 = dma.hbm_to_vmem [thread:$0]  %s2, 128, %s382, [#allocation5], 64, 64, 4
        $region20: #{net_forward.1} parent=11 // pred_fallthru
          _
        // Predicated region
        $region21: #{net_forward.1} parent=11 // pred_check
          %p388 = pneg %p111
        $region22: #{net_forward.1} parent=11 // pred_check_branch
          %390 = sbr.rel (%p388) target = $region24
        $region23: #{net_forward.1} parent=11 // pred_region
          %s392 = ssub.s32 16, 16
          %393 = vsyncadd [#allocation5], %s392
          %s395 = sshll.u32 [#allocation6], 4
          %s396 = int_to_ptr.vmem [resolvable:$true] %s395
          %398 = dma.hbm_to_vmem [thread:$0]  %s3, 16, %s396, [#allocation5]
        $region24: #{net_forward.1} parent=11 // pred_fallthru
          _
        // Predicated region
        $region25: #{net_forward.1} parent=11 // pred_check
          %p399 = pneg %p132
        $region26: #{net_forward.1} parent=11 // pred_check_branch
          %401 = sbr.rel (%p399) target = $region28
        $region27: #{net_forward.1} parent=11 // pred_region
          _
        $region28: #{net_forward.1} parent=11 // pred_fallthru
          _
        // Predicated region
        $region29: #{net_forward.1} parent=11 // pred_check
          %p402 = pneg %p153
        $region30: #{net_forward.1} parent=11 // pred_check_branch
          %404 = sbr.rel (%p402) target = $region32
        $region31: #{net_forward.1} parent=11 // pred_region
          _
        $region32: #{net_forward.1} parent=11 // pred_fallthru
          _
        // Predicated region
        $region33: #{net_forward.1} parent=11 // pred_check
          %p405 = pneg %p174
        $region34: #{net_forward.1} parent=11 // pred_check_branch
          %407 = sbr.rel (%p405) target = $region36
        $region35: #{net_forward.1} parent=11 // pred_region
          _
        $region36: #{net_forward.1} parent=11 // pred_fallthru
          _
        // Predicated region
        $region37: #{net_forward.1} parent=11 // pred_check
          %p408 = pneg %p195
        $region38: #{net_forward.1} parent=11 // pred_check_branch
          %410 = sbr.rel (%p408) target = $region40
        $region39: #{net_forward.1} parent=11 // pred_region
          _
        $region40: #{net_forward.1} parent=11 // pred_fallthru
          _
        // Predicated region
        $region41: #{net_forward.1} parent=11 // pred_check
          %p411 = pneg %p216
        $region42: #{net_forward.1} parent=11 // pred_check_branch
          %413 = sbr.rel (%p411) target = $region44
        $region43: #{net_forward.1} parent=11 // pred_region
          _
        $region44: #{net_forward.1} parent=11 // pred_fallthru
          _
        // Predicated region
        $region45: #{net_forward.1} parent=11 // pred_check
          %p414 = pneg %p237
        $region46: #{net_forward.1} parent=11 // pred_check_branch
          %416 = sbr.rel (%p414) target = $region48
        $region47: #{net_forward.1} parent=11 // pred_region
          _
        $region48: #{net_forward.1} parent=11 // pred_fallthru
          _
        // Predicated region
        $region49: #{net_forward.1} parent=11 // pred_check
          %p417 = pneg %p258
        $region50: #{net_forward.1} parent=11 // pred_check_branch
          %419 = sbr.rel (%p417) target = $region52
        $region51: #{net_forward.1} parent=11 // pred_region
          _
        $region52: #{net_forward.1} parent=11 // pred_fallthru
          _
        // Predicated region
        $region53: #{net_forward.1} parent=11 // pred_check
          %p420 = pneg %p279
        $region54: #{net_forward.1} parent=11 // pred_check_branch
          %422 = sbr.rel (%p420) target = $region56
        $region55: #{net_forward.1} parent=11 // pred_region
          _
        $region56: #{net_forward.1} parent=11 // pred_fallthru
          _
        // Predicated region
        $region57: #{net_forward.1} parent=11 // pred_check
          %p423 = pneg %p300
        $region58: #{net_forward.1} parent=11 // pred_check_branch
          %425 = sbr.rel (%p423) target = $region60
        $region59: #{net_forward.1} parent=11 // pred_region
          _
        $region60: #{net_forward.1} parent=11 // pred_fallthru
          _
        // Predicated region
        $region61: #{net_forward.1} parent=11 // pred_check
          %p426 = pneg %p321
        $region62: #{net_forward.1} parent=11 // pred_check_branch
          %428 = sbr.rel (%p426) target = $region64
        $region63: #{net_forward.1} parent=11 // pred_region
          _
        $region64: #{net_forward.1} parent=11 // pred_fallthru
          _
      $region12: #{net_forward.1} parent=5 // pred_fallthru
        _
      %p429 = scmp.lt.s32.totalorder %s22, 2
      // Predicated region
      $region65: #{net_forward.1} parent=5 // pred_check
        %p430 = pneg %p429
      $region66: #{net_forward.1} parent=5 // pred_check_branch
        %432 = sbr.rel (%p430) target = $region68
      $region67: #{net_forward.1} parent=5 // pred_region
        // Predicated region
        $region69: #{net_forward.1} parent=67 // pred_check
          %p433 = pneg %p42
        $region70: #{net_forward.1} parent=67 // pred_check_branch
          %435 = sbr.rel (%p433) target = $region72
        $region71: #{net_forward.1} parent=67 // pred_region
          %s436 = smul.u32 2, %s22
          %p437 = scmp.lt.s32.totalorder %s436, 3
          %s438 = scalar_select %p437, %s436, 3
          %s439 = smul.addr %s438, 4
          %s440 = scalar_lea.vmem %s0, %s439
          %s441 = smul.u32 2, %s22
        $region72: #{net_forward.1} parent=67 // pred_fallthru
          _
      $region68: #{net_forward.1} parent=5 // pred_fallthru
        _
      %p442 = scmp.le.s32.totalorder 1, %s22
      %p443 = scmp.lt.s32.totalorder %s22, 3
      %p444 = pnand %p442, %p443
      %p445 = pneg %p444
      // Predicated region
      $region73: #{net_forward.1} parent=5 // pred_check
        _
      $region74: #{net_forward.1} parent=5 // pred_check_branch
        %447 = sbr.rel (%p444) target = $region76
      $region75: #{net_forward.1} parent=5 // pred_region
        %s448 = ssub.s32 %s22, 1
        // Predicated region
        $region77: #{net_forward.1} parent=75 // pred_check
          %p449 = pneg %p69
        $region78: #{net_forward.1} parent=75 // pred_check_branch
          %451 = sbr.rel (%p449) target = $region80
        $region79: #{net_forward.1} parent=75 // pred_region
          %452 = dma.done [#allocation3], 128
        $region80: #{net_forward.1} parent=75 // pred_fallthru
          _
        // Predicated region
        $region81: #{net_forward.1} parent=75 // pred_check
          %p453 = pneg %p90
        $region82: #{net_forward.1} parent=75 // pred_check_branch
          %455 = sbr.rel (%p453) target = $region84
        $region83: #{net_forward.1} parent=75 // pred_region
          %456 = dma.done [#allocation5], 128
        $region84: #{net_forward.1} parent=75 // pred_fallthru
          _
        // Predicated region
        $region85: #{net_forward.1} parent=75 // pred_check
          %p457 = pneg %p111
        $region86: #{net_forward.1} parent=75 // pred_check_branch
          %459 = sbr.rel (%p457) target = $region88
        $region87: #{net_forward.1} parent=75 // pred_region
          %460 = dma.done [#allocation5], 16
        $region88: #{net_forward.1} parent=75 // pred_fallthru
          _
        %s461 = smul.u32 2, %s27
        %p462 = scmp.lt.s32.totalorder %s461, 3
        %s463 = scalar_select %p462, %s461, 3
        %s464 = smul.addr %s463, 4
        %s465 = scalar_lea.vmem %s0, %s464
        %p466 = pneg %p48
        %p467 = pneg %p45
        %p468 = pneg %p69
        %p469 = pneg %p66
        %p470 = pneg %p90
        %p471 = pneg %p87
        %p472 = pneg %p111
        %p473 = pneg %p108
        %p474 = pneg %p132
        %p475 = pneg %p129
        %p476 = pneg %p153
        %p477 = pneg %p150
        %p478 = pneg %p174
        %p479 = pneg %p171
        %p480 = pneg %p195
        %p481 = pneg %p192
        %p482 = pneg %p216
        %p483 = pneg %p213
        %p484 = pneg %p237
        %p485 = pneg %p234
        %p486 = pneg %p258
        %p487 = pneg %p255
        %p488 = pneg %p279
        %p489 = pneg %p276
        %p490 = pneg %p300
        %p491 = pneg %p297
        %p492 = pneg %p321
        %p493 = pneg %p318
        %p494 = pneg %p347
        %p495 = pneg %p344
        %s496 = smul.u32 2, %s27
        %p497 = scmp.lt.s32.totalorder %s496, 3
        %s498 = scalar_select %p497, %s496, 3
        %s499 = smul.addr %s498, 8
        %s500 = scalar_lea.vmem %s14, %s499
        %s501 = smul.u32 2, %s27
        %p502 = scmp.lt.s32.totalorder %s501, 3
        %s503 = scalar_select %p502, %s501, 3
        %s504 = smul.addr %s503, 4
        %s505 = scalar_lea.vmem %s0, %s504
        %s506 = smul.u32 2, %s27
        %s507 = smul.u32 2, %s27
        %p508 = scmp.lt.s32.totalorder %s507, 3
        %s509 = scalar_select %p508, %s507, 3
        %s510 = smul.addr %s509, 8
        %s511 = scalar_lea.vmem %s14, %s510
        %s512 = smul.u32 2, %s27
        %v514 = vld [vmem:[%s505] sm:$0xf]
        %v515 = vld [vmem:[%s505 + $0x4] sm:$0xf]
        %v516 = vld [vmem:[#allocation2] sm:$0xf]
        %v517 = vld [vmem:[#allocation2 + $0x4] sm:$0x3]
        %v518 = vld [vmem:[#allocation6] sm:$0x1]
        %v520 = vlaneseq
        %v521 = vshrl.u32 %v520, 7
        %v522 = vsub.s32 0, %v521
        %v523 = vrot.slane %v518, %v522
        %v527 = vunpack.c.l.b16 %v514
        %v528 = vunpack.c.l.b16 %v515
        %v529 = vpack.c.b16 %v528, %v527
        %v532 = vunpack.c.l.b16 %v516
        %v533 = vunpack.c.l.b16 %v517
        %v534 = vpack.c.b16 %v533, %v532
        %vm535 = vcmask 97280
        %v537 = vsel %vm535, %v529, 0
        %vm539 = vcmask 1045504
        %v541 = vsel %vm539, %v534, 0
        %543 = vmatprep.subr.bf16.mxu0 0
        %544 = vmatpush1.bf16.msra.mxu0 %v541
        %545 = vmatprep.subr.bf16.mxu0 0
        %546 = vmatpush1.bf16.msra.mxu0 0
        %547 = vmatprep.subr.bf16.mxu0 0
        %548 = vmatpush1.bf16.msra.mxu0 0
        %549 = vmatprep.subr.bf16.mxu0 0
        %550 = vmatpush1.bf16.msra.mxu0 0
        %551 = vmatprep.subr.bf16.mxu0 0
        %552 = vmatpush1.bf16.msra.mxu0 0
        %553 = vmatprep.subr.bf16.mxu0 0
        %554 = vmatpush1.bf16.msra.mxu0 0
        %555 = vmatprep.subr.bf16.mxu0 0
        %556 = vmatpush1.bf16.msra.mxu0 0
        %557 = vmatprep.subr.bf16.mxu0 0
        %558 = vmatpush1.bf16.msra.mxu0 0
        %559 = vmatprep.subr.bf16.mxu0 0
        %560 = vmatpush1.bf16.msra.mxu0 0
        %561 = vmatprep.subr.bf16.mxu0 0
        %562 = vmatpush1.bf16.msra.mxu0 0
        %563 = vmatprep.subr.bf16.mxu0 0
        %564 = vmatpush1.bf16.msra.mxu0 0
        %565 = vmatprep.subr.bf16.mxu0 0
        %566 = vmatpush1.bf16.msra.mxu0 0
        %567 = vmatprep.subr.bf16.mxu0 0
        %568 = vmatpush1.bf16.msra.mxu0 0
        %569 = vmatprep.subr.bf16.mxu0 0
        %570 = vmatpush1.bf16.msra.mxu0 0
        %571 = vmatprep.subr.bf16.mxu0 0
        %572 = vmatpush1.bf16.msra.mxu0 0
        %573 = vmatprep.subr.bf16.mxu0 0
        %574 = vmatpush1.bf16.msra.mxu0 0
        %575 = vmatprep.mubr.bf16.mxu0 0
        %576 = vmatmul.mubr.bf16.gmra.mrb[0].mxu0 %v537
        %v577 = vpop.f32.mrb[0].mxu0
        %v578 = vadd.f32 %v523, %v577
        %v579 = vpop.f32.mrb[0].mxu0
        %v580 = vpop.f32.mrb[0].mxu0
        %v581 = vadd.f32 %v523, %v580
        %v582 = vpop.f32.mrb[0].mxu0
        %583 = vdwg.mxu0
        %v584 = vmax.f32 %v578, 0.0
        %v585 = vmax.f32 %v581, 0.0
        %v586 = vld [vmem:[#allocation4] sm:$0xf]
        %v587 = vld [vmem:[#allocation4 + $0x4] sm:$0x3]
        %v588 = vld [vmem:[%s4] sm:$0x1]
        %v590 = vlaneseq
        %v591 = vshrl.u32 %v590, 7
        %v592 = vsub.s32 0, %v591
        %v593 = vrot.slane %v588, %v592
        %v597 = vunpack.c.l.b16 %v586
        %v598 = vunpack.c.l.b16 %v587
        %v599 = vpack.c.b16 %v598, %v597
        %v601 = vsel %vm539, %v599, 0
        %603 = vmatprep.subr.bf16.mxu0 0
        %604 = vmatpush1.bf16.msra.mxu0 %v601
        %605 = vmatprep.subr.bf16.mxu0 0
        %606 = vmatpush1.bf16.msra.mxu0 0
        %607 = vmatprep.subr.bf16.mxu0 0
        %608 = vmatpush1.bf16.msra.mxu0 0
        %609 = vmatprep.subr.bf16.mxu0 0
        %610 = vmatpush1.bf16.msra.mxu0 0
        %611 = vmatprep.subr.bf16.mxu0 0
        %612 = vmatpush1.bf16.msra.mxu0 0
        %613 = vmatprep.subr.bf16.mxu0 0
        %614 = vmatpush1.bf16.msra.mxu0 0
        %615 = vmatprep.subr.bf16.mxu0 0
        %616 = vmatpush1.bf16.msra.mxu0 0
        %617 = vmatprep.subr.bf16.mxu0 0
        %618 = vmatpush1.bf16.msra.mxu0 0
        %619 = vmatprep.subr.bf16.mxu0 0
        %620 = vmatpush1.bf16.msra.mxu0 0
        %621 = vmatprep.subr.bf16.mxu0 0
        %622 = vmatpush1.bf16.msra.mxu0 0
        %623 = vmatprep.subr.bf16.mxu0 0
        %624 = vmatpush1.bf16.msra.mxu0 0
        %625 = vmatprep.subr.bf16.mxu0 0
        %626 = vmatpush1.bf16.msra.mxu0 0
        %627 = vmatprep.subr.bf16.mxu0 0
        %628 = vmatpush1.bf16.msra.mxu0 0
        %629 = vmatprep.subr.bf16.mxu0 0
        %630 = vmatpush1.bf16.msra.mxu0 0
        %631 = vmatprep.subr.bf16.mxu0 0
        %632 = vmatpush1.bf16.msra.mxu0 0
        %633 = vmatprep.subr.bf16.mxu0 0
        %634 = vmatpush1.bf16.msra.mxu0 0
        %635 = vmatprep.mubr.bf16.mxu0 0
        %636 = vmatmul.mubr.bf16.gmra.mrb[0].mxu0 %v537
        %v637 = vpop.f32.mrb[0].mxu0
        %v638 = vadd.f32 %v593, %v637
        %v639 = vpop.f32.mrb[0].mxu0
        %v640 = vpop.f32.mrb[0].mxu0
        %v641 = vadd.f32 %v593, %v640
        %v642 = vpop.f32.mrb[0].mxu0
        %643 = vdwg.mxu0
        %v644 = vmax.f32 %v638, 0.0
        %v645 = vmax.f32 %v641, 0.0
        %v646 = vpack.c.bf16 %v585, %v584
        %v647 = vld [vmem:[%s5] sm:$0xff]
        %v648 = vld [vmem:[%s5 + $0x8] sm:$0xff]
        %v649 = vld [vmem:[%s5 + $0x10] sm:$0xff]
        %v650 = vld [vmem:[%s5 + $0x18] sm:$0xff]
        %v651 = vld [vmem:[%s5 + $0x20] sm:$0xff]
        %v652 = vld [vmem:[%s5 + $0x28] sm:$0xff]
        %v653 = vld [vmem:[%s5 + $0x30] sm:$0xff]
        %v654 = vld [vmem:[%s5 + $0x38] sm:$0xff]
        %v655 = vld [vmem:[%s5 + $0x40] sm:$0xff]
        %v656 = vld [vmem:[%s5 + $0x48] sm:$0xff]
        %v657 = vld [vmem:[%s5 + $0x50] sm:$0xff]
        %v658 = vld [vmem:[%s5 + $0x58] sm:$0xff]
        %v659 = vld [vmem:[%s5 + $0x60] sm:$0xff]
        %v660 = vld [vmem:[%s5 + $0x68] sm:$0xff]
        %v661 = vld [vmem:[%s5 + $0x70] sm:$0xff]
        %v662 = vld [vmem:[%s7] sm:$0x3]
        %v664 = vlaneseq
        %v665 = vshrl.u32 %v664, 7
        %v666 = vsub.s32 0, %v665
        %v667 = vrot.slane %v662, %v666
        %v668 = vlaneseq
        %v669 = vshrl.u32 %v668, 7
        %v670 = vsub.s32 1, %v669
        %v671 = vrot.slane %v662, %v670
        %v689 = vunpack.c.l.b16 %v647
        %v690 = vunpack.c.h.b16 %v647
        %v691 = vunpack.c.l.b16 %v648
        %v692 = vunpack.c.h.b16 %v648
        %v693 = vunpack.c.l.b16 %v649
        %v694 = vunpack.c.h.b16 %v649
        %v695 = vunpack.c.l.b16 %v650
        %v696 = vunpack.c.h.b16 %v650
        %v697 = vunpack.c.l.b16 %v651
        %v698 = vunpack.c.h.b16 %v651
        %v699 = vunpack.c.l.b16 %v652
        %v700 = vunpack.c.h.b16 %v652
        %v701 = vunpack.c.l.b16 %v653
        %v702 = vunpack.c.h.b16 %v653
        %v703 = vunpack.c.l.b16 %v654
        %v704 = vunpack.c.h.b16 %v654
        %v705 = vunpack.c.l.b16 %v655
        %v706 = vunpack.c.h.b16 %v655
        %v707 = vunpack.c.l.b16 %v656
        %v708 = vunpack.c.h.b16 %v656
        %v709 = vunpack.c.l.b16 %v657
        %v710 = vunpack.c.h.b16 %v657
        %v711 = vunpack.c.l.b16 %v658
        %v712 = vunpack.c.h.b16 %v658
        %v713 = vunpack.c.l.b16 %v659
        %v714 = vunpack.c.h.b16 %v659
        %v715 = vunpack.c.l.b16 %v660
        %v716 = vunpack.c.h.b16 %v660
        %v717 = vunpack.c.l.b16 %v661
        %v718 = vunpack.c.h.b16 %v661
        %v719 = vpack.c.b16 %v691, %v689
        %v720 = vpack.c.b16 %v692, %v690
        %v721 = vpack.c.b16 %v695, %v693
        %v722 = vpack.c.b16 %v696, %v694
        %v723 = vpack.c.b16 %v699, %v697
        %v724 = vpack.c.b16 %v700, %v698
        %v725 = vpack.c.b16 %v703, %v701
        %v726 = vpack.c.b16 %v704, %v702
        %v727 = vpack.c.b16 %v707, %v705
        %v728 = vpack.c.b16 %v708, %v706
        %v729 = vpack.c.b16 %v711, %v709
        %v730 = vpack.c.b16 %v712, %v710
        %v731 = vpack.c.b16 %v715, %v713
        %v732 = vpack.c.b16 %v716, %v714
        %v733 = vpack.c.b16 %v717, %v717
        %v734 = vpack.c.b16 %v718, %v718
        %vm749 = vcmask 982016
        %v751 = vsel %vm749, %v646, 0
        %vm753 = vcmask 1043456
        %v755 = vsel %vm753, %v733, 0
        %v758 = vsel %vm753, %v734, 0
        %760 = vmatprep.subr.bf16.mxu0 %v720
        %761 = vmatpush1.bf16.msra.mxu0 %v719
        %762 = vmatprep.subr.bf16.mxu0 %v722
        %763 = vmatpush1.bf16.msra.mxu0 %v721
        %764 = vmatprep.subr.bf16.mxu0 %v724
        %765 = vmatpush1.bf16.msra.mxu0 %v723
        %766 = vmatprep.subr.bf16.mxu0 %v726
        %767 = vmatpush1.bf16.msra.mxu0 %v725
        %768 = vmatprep.subr.bf16.mxu0 %v728
        %769 = vmatpush1.bf16.msra.mxu0 %v727
        %770 = vmatprep.subr.bf16.mxu0 %v730
        %771 = vmatpush1.bf16.msra.mxu0 %v729
        %772 = vmatprep.subr.bf16.mxu0 %v732
        %773 = vmatpush1.bf16.msra.mxu0 %v731
        %774 = vmatprep.subr.bf16.mxu0 %v758
        %775 = vmatpush1.bf16.msra.mxu0 %v755
        %776 = vmatprep.subr.bf16.mxu0 0
        %777 = vmatpush1.bf16.msra.mxu0 0
        %778 = vmatprep.subr.bf16.mxu0 0
        %779 = vmatpush1.bf16.msra.mxu0 0
        %780 = vmatprep.subr.bf16.mxu0 0
        %781 = vmatpush1.bf16.msra.mxu0 0
        %782 = vmatprep.subr.bf16.mxu0 0
        %783 = vmatpush1.bf16.msra.mxu0 0
        %784 = vmatprep.subr.bf16.mxu0 0
        %785 = vmatpush1.bf16.msra.mxu0 0
        %786 = vmatprep.subr.bf16.mxu0 0
        %787 = vmatpush1.bf16.msra.mxu0 0
        %788 = vmatprep.subr.bf16.mxu0 0
        %789 = vmatpush1.bf16.msra.mxu0 0
        %790 = vmatprep.subr.bf16.mxu0 0
        %791 = vmatpush1.bf16.msra.mxu0 0
        %792 = vmatprep.mubr.bf16.mxu0 0
        %793 = vmatmul.mubr.bf16.gmra.mrb[0].mxu0 %v751
        %v794 = vpop.f32.mrb[0].mxu0
        %v795 = vadd.f32 %v667, %v794
        %v796 = vpop.f32.mrb[0].mxu0
        %v797 = vadd.f32 %v671, %v796
        %v798 = vpop.f32.mrb[0].mxu0
        %v799 = vadd.f32 %v667, %v798
        %v800 = vpop.f32.mrb[0].mxu0
        %v801 = vadd.f32 %v671, %v800
        %802 = vdwg.mxu0
        %v803 = vtanh.pop %v795
        %v804 = vtanh.pop %v797
        %v805 = vtanh.pop %v799
        %v806 = vtanh.pop %v801
        %v807 = vpack.c.bf16 %v645, %v644
        %v808 = vld [vmem:[%s6] sm:$0xff]
        %v809 = vld [vmem:[%s6 + $0x8] sm:$0xff]
        %v810 = vld [vmem:[%s6 + $0x10] sm:$0xff]
        %v811 = vld [vmem:[%s6 + $0x18] sm:$0xff]
        %v812 = vld [vmem:[%s6 + $0x20] sm:$0xff]
        %v813 = vld [vmem:[%s8] sm:$0x3]
        %v815 = vlaneseq
        %v816 = vshrl.u32 %v815, 7
        %v817 = vsub.s32 0, %v816
        %v818 = vrot.slane %v813, %v817
        %v819 = vlaneseq
        %v820 = vshrl.u32 %v819, 7
        %v821 = vsub.s32 1, %v820
        %v822 = vrot.slane %v813, %v821
        %v830 = vunpack.c.l.b16 %v808
        %v831 = vunpack.c.h.b16 %v808
        %v832 = vunpack.c.l.b16 %v809
        %v833 = vunpack.c.h.b16 %v809
        %v834 = vunpack.c.l.b16 %v810
        %v835 = vunpack.c.h.b16 %v810
        %v836 = vunpack.c.l.b16 %v811
        %v837 = vunpack.c.h.b16 %v811
        %v838 = vunpack.c.l.b16 %v812
        %v839 = vunpack.c.h.b16 %v812
        %v840 = vpack.c.b16 %v832, %v830
        %v841 = vpack.c.b16 %v833, %v831
        %v842 = vpack.c.b16 %v836, %v834
        %v843 = vpack.c.b16 %v837, %v835
        %v844 = vpack.c.b16 %v838, %v838
        %v845 = vpack.c.b16 %v839, %v839
        %vm850 = vcmask 326656
        %v852 = vsel %vm850, %v807, 0
        %v855 = vsel %vm753, %v844, 0
        %v858 = vsel %vm753, %v845, 0
        %860 = vmatprep.subr.bf16.mxu0 %v841
        %861 = vmatpush1.bf16.msra.mxu0 %v840
        %862 = vmatprep.subr.bf16.mxu0 %v843
        %863 = vmatpush1.bf16.msra.mxu0 %v842
        %864 = vmatprep.subr.bf16.mxu0 %v858
        %865 = vmatpush1.bf16.msra.mxu0 %v855
        %866 = vmatprep.subr.bf16.mxu0 0
        %867 = vmatpush1.bf16.msra.mxu0 0
        %868 = vmatprep.subr.bf16.mxu0 0
        %869 = vmatpush1.bf16.msra.mxu0 0
        %870 = vmatprep.subr.bf16.mxu0 0
        %871 = vmatpush1.bf16.msra.mxu0 0
        %872 = vmatprep.subr.bf16.mxu0 0
        %873 = vmatpush1.bf16.msra.mxu0 0
        %874 = vmatprep.subr.bf16.mxu0 0
        %875 = vmatpush1.bf16.msra.mxu0 0
        %876 = vmatprep.subr.bf16.mxu0 0
        %877 = vmatpush1.bf16.msra.mxu0 0
        %878 = vmatprep.subr.bf16.mxu0 0
        %879 = vmatpush1.bf16.msra.mxu0 0
        %880 = vmatprep.subr.bf16.mxu0 0
        %881 = vmatpush1.bf16.msra.mxu0 0
        %882 = vmatprep.subr.bf16.mxu0 0
        %883 = vmatpush1.bf16.msra.mxu0 0
        %884 = vmatprep.subr.bf16.mxu0 0
        %885 = vmatpush1.bf16.msra.mxu0 0
        %886 = vmatprep.subr.bf16.mxu0 0
        %887 = vmatpush1.bf16.msra.mxu0 0
        %888 = vmatprep.subr.bf16.mxu0 0
        %889 = vmatpush1.bf16.msra.mxu0 0
        %890 = vmatprep.subr.bf16.mxu0 0
        %891 = vmatpush1.bf16.msra.mxu0 0
        %892 = vmatprep.mubr.bf16.mxu0 0
        %893 = vmatmul.mubr.bf16.gmra.mrb[0].mxu0 %v852
        %v894 = vpop.f32.mrb[0].mxu0
        %v895 = vadd.f32 %v818, %v894
        %v896 = vpop.f32.mrb[0].mxu0
        %v897 = vadd.f32 %v822, %v896
        %v898 = vpop.f32.mrb[0].mxu0
        %v899 = vadd.f32 %v818, %v898
        %v900 = vpop.f32.mrb[0].mxu0
        %v901 = vadd.f32 %v822, %v900
        %902 = vdwg.mxu0
        %v903 = vtanh.pop %v895
        %v904 = vtanh.pop %v897
        %v905 = vtanh.pop %v899
        %v906 = vtanh.pop %v901
        %v907 = vpack.c.bf16 %v805, %v803
        %v908 = vpack.c.bf16 %v806, %v804
        %v909 = vld [vmem:[%s9] sm:$0xf]
        %v910 = vld [vmem:[%s9 + $0x4] sm:$0xf]
        %v911 = vld [vmem:[%s9 + $0x8] sm:$0xf]
        %v912 = vld [vmem:[%s9 + $0xc] sm:$0xf]
        %v913 = vld [vmem:[%s9 + $0x10] sm:$0xf]
        %v914 = vld [vmem:[%s9 + $0x14] sm:$0xf]
        %v915 = vld [vmem:[%s9 + $0x18] sm:$0xf]
        %v916 = vld [vmem:[%s9 + $0x1c] sm:$0xf]
        %v917 = vld [vmem:[%s9 + $0x20] sm:$0xf]
        %v918 = vld [vmem:[%s9 + $0x24] sm:$0xf]
        %v919 = vld [vmem:[%s9 + $0x28] sm:$0xf]
        %v920 = vld [vmem:[%s9 + $0x2c] sm:$0xf]
        %v921 = vld [vmem:[%s9 + $0x30] sm:$0xf]
        %v922 = vld [vmem:[%s9 + $0x34] sm:$0xf]
        %v923 = vld [vmem:[%s9 + $0x38] sm:$0xf]
        %v924 = vld [vmem:[%s9 + $0x3c] sm:$0xf]
        %v925 = vld [vmem:[%s9 + $0x40] sm:$0xf]
        %v926 = vld [vmem:[%s9 + $0x44] sm:$0xf]
        %v927 = vld [vmem:[%s9 + $0x48] sm:$0xf]
        %v928 = vld [vmem:[%s9 + $0x4c] sm:$0xf]
        %v929 = vld [vmem:[%s9 + $0x50] sm:$0xf]
        %v930 = vld [vmem:[%s9 + $0x54] sm:$0xf]
        %v931 = vld [vmem:[%s9 + $0x58] sm:$0xf]
        %v932 = vld [vmem:[%s9 + $0x5c] sm:$0xf]
        %v933 = vld [vmem:[%s9 + $0x60] sm:$0xf]
        %v934 = vpack.c.bf16 %v905, %v903
        %v935 = vpack.c.bf16 %v906, %v904
        %v936 = vld [vmem:[%s10] sm:$0xf]
        %v937 = vld [vmem:[%s10 + $0x4] sm:$0xf]
        %v938 = vld [vmem:[%s10 + $0x8] sm:$0xf]
        %v939 = vld [vmem:[%s10 + $0xc] sm:$0xf]
        %v940 = vld [vmem:[%s10 + $0x10] sm:$0xf]
        %v941 = vld [vmem:[%s10 + $0x14] sm:$0xf]
        %v942 = vld [vmem:[%s10 + $0x18] sm:$0xf]
        %v943 = vld [vmem:[%s10 + $0x1c] sm:$0xf]
        %v944 = vld [vmem:[%s10 + $0x20] sm:$0xf]
        %v945 = vld [vmem:[%s10 + $0x24] sm:$0xf]
        %v946 = vld [vmem:[%s10 + $0x28] sm:$0xf]
        %v947 = vld [vmem:[%s10 + $0x2c] sm:$0xf]
        %v948 = vld [vmem:[%s10 + $0x30] sm:$0xf]
        %v949 = vld [vmem:[%s10 + $0x34] sm:$0xf]
        %v950 = vld [vmem:[%s10 + $0x38] sm:$0xf]
        %v951 = vld [vmem:[%s10 + $0x3c] sm:$0xf]
        %v952 = vld [vmem:[%s10 + $0x40] sm:$0xf]
        %v953 = vld [vmem:[%s10 + $0x44] sm:$0xf]
        %v954 = vld [vmem:[%s10 + $0x48] sm:$0xf]
        %v955 = vld [vmem:[%s10 + $0x4c] sm:$0xf]
        %v956 = vld [vmem:[%s10 + $0x50] sm:$0xf]
        %v957 = vld [vmem:[%s10 + $0x54] sm:$0xf]
        %v958 = vld [vmem:[%s10 + $0x58] sm:$0xf]
        %v959 = vld [vmem:[%s10 + $0x5c] sm:$0xf]
        %v960 = vld [vmem:[%s10 + $0x60] sm:$0xf]
        %v986 = vunpack.c.l.b16 %v936
        %v987 = vunpack.c.l.b16 %v937
        %v988 = vunpack.c.l.b16 %v938
        %v989 = vunpack.c.l.b16 %v939
        %v990 = vunpack.c.l.b16 %v940
        %v991 = vunpack.c.l.b16 %v941
        %v992 = vunpack.c.l.b16 %v942
        %v993 = vunpack.c.l.b16 %v943
        %v994 = vunpack.c.l.b16 %v944
        %v995 = vunpack.c.l.b16 %v945
        %v996 = vunpack.c.l.b16 %v946
        %v997 = vunpack.c.l.b16 %v947
        %v998 = vunpack.c.l.b16 %v948
        %v999 = vunpack.c.l.b16 %v949
        %v1000 = vunpack.c.l.b16 %v950
        %v1001 = vunpack.c.l.b16 %v951
        %v1002 = vunpack.c.l.b16 %v952
        %v1003 = vunpack.c.l.b16 %v953
        %v1004 = vunpack.c.l.b16 %v954
        %v1005 = vunpack.c.l.b16 %v955
        %v1006 = vunpack.c.l.b16 %v956
        %v1007 = vunpack.c.l.b16 %v957
        %v1008 = vunpack.c.l.b16 %v958
        %v1009 = vunpack.c.l.b16 %v959
        %v1010 = vunpack.c.l.b16 %v960
        %v1011 = vpack.c.b16 %v987, %v986
        %v1012 = vpack.c.b16 %v989, %v988
        %v1013 = vpack.c.b16 %v991, %v990
        %v1014 = vpack.c.b16 %v993, %v992
        %v1015 = vpack.c.b16 %v995, %v994
        %v1016 = vpack.c.b16 %v997, %v996
        %v1017 = vpack.c.b16 %v999, %v998
        %v1018 = vpack.c.b16 %v1001, %v1000
        %v1019 = vpack.c.b16 %v1003, %v1002
        %v1020 = vpack.c.b16 %v1005, %v1004
        %v1021 = vpack.c.b16 %v1007, %v1006
        %v1022 = vpack.c.b16 %v1009, %v1008
        %v1023 = vpack.c.b16 %v1010, %v1010
        %vm1036 = vcmask 588800
        %v1038 = vsel %vm1036, %v935, 0
        %v1041 = vsel %vm753, %v1023, 0
        %1043 = vmatprep.subr.bf16.mxu0 0
        %1044 = vmatpush1.bf16.msra.mxu0 %v1011
        %1045 = vmatprep.subr.bf16.mxu0 0
        %1046 = vmatpush1.bf16.msra.mxu0 %v1012
        %1047 = vmatprep.subr.bf16.mxu0 0
        %1048 = vmatpush1.bf16.msra.mxu0 %v1013
        %1049 = vmatprep.subr.bf16.mxu0 0
        %1050 = vmatpush1.bf16.msra.mxu0 %v1014
        %1051 = vmatprep.subr.bf16.mxu0 0
        %1052 = vmatpush1.bf16.msra.mxu0 %v1015
        %1053 = vmatprep.subr.bf16.mxu0 0
        %1054 = vmatpush1.bf16.msra.mxu0 %v1016
        %1055 = vmatprep.subr.bf16.mxu0 0
        %1056 = vmatpush1.bf16.msra.mxu0 %v1017
        %1057 = vmatprep.subr.bf16.mxu0 0
        %1058 = vmatpush1.bf16.msra.mxu0 %v1018
        %1059 = vmatprep.subr.bf16.mxu0 0
        %1060 = vmatpush1.bf16.msra.mxu0 %v1019
        %1061 = vmatprep.subr.bf16.mxu0 0
        %1062 = vmatpush1.bf16.msra.mxu0 %v1020
        %1063 = vmatprep.subr.bf16.mxu0 0
        %1064 = vmatpush1.bf16.msra.mxu0 %v1021
        %1065 = vmatprep.subr.bf16.mxu0 0
        %1066 = vmatpush1.bf16.msra.mxu0 %v1022
        %1067 = vmatprep.subr.bf16.mxu0 0
        %1068 = vmatpush1.bf16.msra.mxu0 %v1041
        %1069 = vmatprep.subr.bf16.mxu0 0
        %1070 = vmatpush1.bf16.msra.mxu0 0
        %1071 = vmatprep.subr.bf16.mxu0 0
        %1072 = vmatpush1.bf16.msra.mxu0 0
        %1073 = vmatprep.subr.bf16.mxu0 0
        %1074 = vmatpush1.bf16.msra.mxu0 0
        %1075 = vmatprep.mubr.bf16.mxu0 %v1038
        %1076 = vmatmul.mubr.bf16.gmra.mrb[0].mxu0 %v934
        %v1077 = vpop.f32.mrb[0].mxu0
        %v1078 = vadd.f32 0.0, %v1077
        %v1079 = vpop.f32.mrb[0].mxu0
        %v1080 = vpop.f32.mrb[0].mxu0
        %v1081 = vadd.f32 0.0, %v1080
        %v1082 = vpop.f32.mrb[0].mxu0
        %1083 = vdwg.mxu0
        %v1109 = vunpack.c.l.b16 %v909
        %v1110 = vunpack.c.l.b16 %v910
        %v1111 = vunpack.c.l.b16 %v911
        %v1112 = vunpack.c.l.b16 %v912
        %v1113 = vunpack.c.l.b16 %v913
        %v1114 = vunpack.c.l.b16 %v914
        %v1115 = vunpack.c.l.b16 %v915
        %v1116 = vunpack.c.l.b16 %v916
        %v1117 = vunpack.c.l.b16 %v917
        %v1118 = vunpack.c.l.b16 %v918
        %v1119 = vunpack.c.l.b16 %v919
        %v1120 = vunpack.c.l.b16 %v920
        %v1121 = vunpack.c.l.b16 %v921
        %v1122 = vunpack.c.l.b16 %v922
        %v1123 = vunpack.c.l.b16 %v923
        %v1124 = vunpack.c.l.b16 %v924
        %v1125 = vunpack.c.l.b16 %v925
        %v1126 = vunpack.c.l.b16 %v926
        %v1127 = vunpack.c.l.b16 %v927
        %v1128 = vunpack.c.l.b16 %v928
        %v1129 = vunpack.c.l.b16 %v929
        %v1130 = vunpack.c.l.b16 %v930
        %v1131 = vunpack.c.l.b16 %v931
        %v1132 = vunpack.c.l.b16 %v932
        %v1133 = vunpack.c.l.b16 %v933
        %v1134 = vpack.c.b16 %v1110, %v1109
        %v1135 = vpack.c.b16 %v1112, %v1111
        %v1136 = vpack.c.b16 %v1114, %v1113
        %v1137 = vpack.c.b16 %v1116, %v1115
        %v1138 = vpack.c.b16 %v1118, %v1117
        %v1139 = vpack.c.b16 %v1120, %v1119
        %v1140 = vpack.c.b16 %v1122, %v1121
        %v1141 = vpack.c.b16 %v1124, %v1123
        %v1142 = vpack.c.b16 %v1126, %v1125
        %v1143 = vpack.c.b16 %v1128, %v1127
        %v1144 = vpack.c.b16 %v1130, %v1129
        %v1145 = vpack.c.b16 %v1132, %v1131
        %v1146 = vpack.c.b16 %v1133, %v1133
        %v1160 = vsel %vm1036, %v908, 0
        %v1163 = vsel %vm753, %v1146, 0
        %1165 = vmatprep.subr.bf16.mxu0 0
        %1166 = vmatpush1.bf16.msra.mxu0 %v1134
        %1167 = vmatprep.subr.bf16.mxu0 0
        %1168 = vmatpush1.bf16.msra.mxu0 %v1135
        %1169 = vmatprep.subr.bf16.mxu0 0
        %1170 = vmatpush1.bf16.msra.mxu0 %v1136
        %1171 = vmatprep.subr.bf16.mxu0 0
        %1172 = vmatpush1.bf16.msra.mxu0 %v1137
        %1173 = vmatprep.subr.bf16.mxu0 0
        %1174 = vmatpush1.bf16.msra.mxu0 %v1138
        %1175 = vmatprep.subr.bf16.mxu0 0
        %1176 = vmatpush1.bf16.msra.mxu0 %v1139
        %1177 = vmatprep.subr.bf16.mxu0 0
        %1178 = vmatpush1.bf16.msra.mxu0 %v1140
        %1179 = vmatprep.subr.bf16.mxu0 0
        %1180 = vmatpush1.bf16.msra.mxu0 %v1141
        %1181 = vmatprep.subr.bf16.mxu0 0
        %1182 = vmatpush1.bf16.msra.mxu0 %v1142
        %1183 = vmatprep.subr.bf16.mxu0 0
        %1184 = vmatpush1.bf16.msra.mxu0 %v1143
        %1185 = vmatprep.subr.bf16.mxu0 0
        %1186 = vmatpush1.bf16.msra.mxu0 %v1144
        %1187 = vmatprep.subr.bf16.mxu0 0
        %1188 = vmatpush1.bf16.msra.mxu0 %v1145
        %1189 = vmatprep.subr.bf16.mxu0 0
        %1190 = vmatpush1.bf16.msra.mxu0 %v1163
        %1191 = vmatprep.subr.bf16.mxu0 0
        %1192 = vmatpush1.bf16.msra.mxu0 0
        %1193 = vmatprep.subr.bf16.mxu0 0
        %1194 = vmatpush1.bf16.msra.mxu0 0
        %1195 = vmatprep.subr.bf16.mxu0 0
        %1196 = vmatpush1.bf16.msra.mxu0 0
        %1197 = vmatprep.mubr.bf16.mxu0 %v1160
        %1198 = vmatmul.mubr.bf16.gmra.mrb[0].mxu0 %v907
        %v1199 = vpop.f32.mrb[0].mxu0
        %v1200 = vadd.f32 %v1078, %v1199
        %v1201 = vpop.f32.mrb[0].mxu0
        %v1202 = vpop.f32.mrb[0].mxu0
        %v1203 = vadd.f32 %v1081, %v1202
        %v1204 = vpop.f32.mrb[0].mxu0
        %1205 = vdwg.mxu0
        %v1206 = vld [vmem:[%s11] sm:$0x1]
        %v1208 = vlaneseq
        %v1209 = vshrl.u32 %v1208, 7
        %v1210 = vsub.s32 0, %v1209
        %v1211 = vrot.slane %v1206, %v1210
        %v1213 = vadd.f32 %v1200, %v1211
        %v1214 = vadd.f32 %v1203, %v1211
        %v1215 = vtanh.pop %v1213
        %v1216 = vtanh.pop %v1214
        %v1217 = vpack.c.bf16 %v1216, %v1215
        %v1218 = vld [vmem:[%s12] sm:$0xf]
        %v1219 = vld [vmem:[%s12 + $0x4] sm:$0xf]
        %v1220 = vld [vmem:[%s12 + $0x8] sm:$0xf]
        %v1221 = vld [vmem:[%s12 + $0xc] sm:$0xf]
        %v1222 = vld [vmem:[%s12 + $0x10] sm:$0xf]
        %v1223 = vld [vmem:[%s12 + $0x14] sm:$0xf]
        %v1224 = vld [vmem:[%s12 + $0x18] sm:$0xf]
        %v1225 = vld [vmem:[%s12 + $0x1c] sm:$0xf]
        %v1226 = vld [vmem:[%s12 + $0x20] sm:$0xf]
        %v1227 = vld [vmem:[%s12 + $0x24] sm:$0xf]
        %v1228 = vld [vmem:[%s12 + $0x28] sm:$0xf]
        %v1229 = vld [vmem:[%s12 + $0x2c] sm:$0xf]
        %v1230 = vld [vmem:[%s12 + $0x30] sm:$0x3]
        %v1231 = vld [vmem:[%s13] sm:$0x1]
        %v1233 = vlaneseq
        %v1234 = vshrl.u32 %v1233, 7
        %v1235 = vsub.s32 0, %v1234
        %v1236 = vrot.slane %v1231, %v1235
        %v1251 = vunpack.c.l.b16 %v1218
        %v1252 = vunpack.c.l.b16 %v1219
        %v1253 = vunpack.c.l.b16 %v1220
        %v1254 = vunpack.c.l.b16 %v1221
        %v1255 = vunpack.c.l.b16 %v1222
        %v1256 = vunpack.c.l.b16 %v1223
        %v1257 = vunpack.c.l.b16 %v1224
        %v1258 = vunpack.c.l.b16 %v1225
        %v1259 = vunpack.c.l.b16 %v1226
        %v1260 = vunpack.c.l.b16 %v1227
        %v1261 = vunpack.c.l.b16 %v1228
        %v1262 = vunpack.c.l.b16 %v1229
        %v1263 = vunpack.c.l.b16 %v1230
        %v1264 = vpack.c.b16 %v1252, %v1251
        %v1265 = vpack.c.b16 %v1254, %v1253
        %v1266 = vpack.c.b16 %v1256, %v1255
        %v1267 = vpack.c.b16 %v1258, %v1257
        %v1268 = vpack.c.b16 %v1260, %v1259
        %v1269 = vpack.c.b16 %v1262, %v1261
        %v1270 = vpack.c.b16 %v1263, %v1263
        %vm1277 = vcmask 818176
        %v1279 = vsel %vm1277, %v1217, 0
        %vm1281 = vcmask 1041408
        %v1283 = vsel %vm1281, %v1270, 0
        %1285 = vmatprep.subr.bf16.mxu0 0
        %1286 = vmatpush1.bf16.msra.mxu0 %v1264
        %1287 = vmatprep.subr.bf16.mxu0 0
        %1288 = vmatpush1.bf16.msra.mxu0 %v1265
        %1289 = vmatprep.subr.bf16.mxu0 0
        %1290 = vmatpush1.bf16.msra.mxu0 %v1266
        %1291 = vmatprep.subr.bf16.mxu0 0
        %1292 = vmatpush1.bf16.msra.mxu0 %v1267
        %1293 = vmatprep.subr.bf16.mxu0 0
        %1294 = vmatpush1.bf16.msra.mxu0 %v1268
        %1295 = vmatprep.subr.bf16.mxu0 0
        %1296 = vmatpush1.bf16.msra.mxu0 %v1269
        %1297 = vmatprep.subr.bf16.mxu0 0
        %1298 = vmatpush1.bf16.msra.mxu0 %v1283
        %1299 = vmatprep.subr.bf16.mxu0 0
        %1300 = vmatpush1.bf16.msra.mxu0 0
        %1301 = vmatprep.subr.bf16.mxu0 0
        %1302 = vmatpush1.bf16.msra.mxu0 0
        %1303 = vmatprep.subr.bf16.mxu0 0
        %1304 = vmatpush1.bf16.msra.mxu0 0
        %1305 = vmatprep.subr.bf16.mxu0 0
        %1306 = vmatpush1.bf16.msra.mxu0 0
        %1307 = vmatprep.subr.bf16.mxu0 0
        %1308 = vmatpush1.bf16.msra.mxu0 0
        %1309 = vmatprep.subr.bf16.mxu0 0
        %1310 = vmatpush1.bf16.msra.mxu0 0
        %1311 = vmatprep.subr.bf16.mxu0 0
        %1312 = vmatpush1.bf16.msra.mxu0 0
        %1313 = vmatprep.subr.bf16.mxu0 0
        %1314 = vmatpush1.bf16.msra.mxu0 0
        %1315 = vmatprep.subr.bf16.mxu0 0
        %1316 = vmatpush1.bf16.msra.mxu0 0
        %1317 = vmatprep.mubr.bf16.mxu0 0
        %1318 = vmatmul.mubr.bf16.gmra.mrb[0].mxu0 %v1279
        %v1319 = vpop.f32.mrb[0].mxu0
        %v1320 = vadd.f32 %v1236, %v1319
        %v1321 = vpop.f32.mrb[0].mxu0
        %v1322 = vpop.f32.mrb[0].mxu0
        %v1323 = vadd.f32 %v1236, %v1322
        %v1324 = vpop.f32.mrb[0].mxu0
        %1325 = vdwg.mxu0
        %1326 = vst [vmem:[%s511] sm:$0xff] %v1320
        %1327 = vst [vmem:[%s511 + $0x8] sm:$0xff] %v1323
        %s1328 = smul.u32 2, %s27
        %p1329 = scmp.lt.s32.totalorder %s1328, 3
        %s1330 = scalar_select %p1329, %s1328, 3
        %s1331 = smul.addr %s1330, 8
        %s1332 = scalar_lea.vmem %s14, %s1331
        // Predicated region
        $region89: #{net_forward.1} parent=75 // pred_check
          %p1333 = pneg %p344
        $region90: #{net_forward.1} parent=75 // pred_check_branch
          %1335 = sbr.rel (%p1333) target = $region92
        $region91: #{net_forward.1} parent=75 // pred_region
          %s1336 = smul.u32 2, %s27
        $region92: #{net_forward.1} parent=75 // pred_fallthru
          _
      $region76: #{net_forward.1} parent=5 // pred_fallthru
        _
      %p1337 = scmp.le.s32.totalorder 2, %s22
      // Predicated region
      $region93: #{net_forward.1} parent=5 // pred_check
        %p1338 = pneg %p1337
      $region94: #{net_forward.1} parent=5 // pred_check_branch
        %1340 = sbr.rel (%p1338) target = $region96
      $region95: #{net_forward.1} parent=5 // pred_region
        %s1341 = ssub.s32 %s22, 2
        // Predicated region
        $region97: #{net_forward.1} parent=95 // pred_check
          %p1342 = pneg %p350
        $region98: #{net_forward.1} parent=95 // pred_check_branch
          %1344 = sbr.rel (%p1342) target = $region100
        $region99: #{net_forward.1} parent=95 // pred_region
          %s1345 = smul.u32 2, %s28
          %p1346 = scmp.lt.s32.totalorder %s1345, 3
          %s1347 = scalar_select %p1346, %s1345, 3
          %s1348 = smul.addr %s1347, 8
          %s1349 = scalar_lea.vmem %s14, %s1348
        $region100: #{net_forward.1} parent=95 // pred_fallthru
          _
      $region96: #{net_forward.1} parent=5 // pred_fallthru
        _
    $region6: #{net_forward.1} parent=1 // loop_footer
      %s26 = sadd.s32 1, %s22
    $region7: #{net_forward.1} parent=1 // loop_footer_branch
      %21 = sbr.rel target = $region3
    $region8: #{net_forward.1} parent=1 // loop_exit
      _
    %1350 = vsyncpa [#allocation3], 1
    %s1351 = scalar_lea.sflag [#allocation3], 1
    %1352 = vsyncpa %s1351, 1
    %1353 = vsyncpa [#allocation5], 1

</llo_original>
